<compile_context>
chip_gen: v7x
topology: tpu7x:2x2x1
jax: 0.10.0
libtpu: 0.0.40
codegen_flags: <defaults>
</compile_context>

<pallas_src>
import numpy as np
import jax
import jax.numpy as jnp
from jax import lax
from jax.experimental import pallas as pl
from jax.experimental.pallas import tpu as pltpu


# ----------------------------- host-side matrices -----------------------------

def _adaptive_pool_matrix(in_size: int, out_size: int) -> np.ndarray:
    """Row-stochastic (out_size, in_size) matrix implementing 1-D adaptive avg pool."""
    P = np.zeros((out_size, in_size), dtype=np.float32)
    for i in range(out_size):
        start = (i * in_size) // out_size
        end = -(-((i + 1) * in_size) // out_size)  # ceil div
        P[i, start:end] = 1.0 / (end - start)
    return P


def _bilinear_upsample_matrix(out_size: int, in_size: int) -> np.ndarray:
    """(out_size, in_size) matrix implementing 1-D bilinear resize, align_corners=True."""
    U = np.zeros((out_size, in_size), dtype=np.float32)
    if in_size == 1:
        U[:, 0] = 1.0
        return U
    for i in range(out_size):
        src = i * (in_size - 1) / (out_size - 1) if out_size > 1 else 0.0
        lo = int(np.floor(src))
        hi = min(lo + 1, in_size - 1)
        w = src - lo
        U[i, lo] += 1.0 - w
        U[i, hi] += w
    return U


# --------------------------------- the kernel ---------------------------------

def _ppm_branch_kernel(x_ref, w_ref, kt_ref, ut_ref, mask_ref, bmask_ref,
                       o_ref, acc_ref):
    k = pl.program_id(2)
    n_k = pl.num_programs(2)

    @pl.when(k == 0)
    def _init():
        acc_ref[...] = jnp.zeros_like(acc_ref)

    # 1) adaptive avg pool for ALL branches on this Cin chunk: one trans_b matmul
    #    (kt stored lane-dense as (S, HW); contract over the HW axis).
    x_chunk = x_ref[0].astype(jnp.bfloat16)                       # (Ct, HW)
    pooled = lax.dot_general(
        x_chunk, kt_ref[...], (((1,), (1,)), ((), ())),
        preferred_element_type=jnp.float32)                       # (Ct, S)

    # 2) all 1x1 convs (BN scale folded into W), accumulated over Cin chunks.
    acc_ref[...] += jnp.dot(w_ref[...], pooled.astype(jnp.bfloat16),
                            preferred_element_type=jnp.float32)   # (c_tile, S)

    @pl.when(k == n_k - 1)
    def _finalize():
        # relu(acc + bias) restricted to each branch's own pooled columns.
        # mask is block-diagonal 0/1 and bmask = bias * mask, so
        #   relu(acc * mask + bmask) == relu(acc + bias) * mask.
        y = jnp.maximum(acc_ref[...] * mask_ref[...] + bmask_ref[...], 0.0)
        # 3) bilinear upsample of every branch via the block-stacked matrix.
        up = jnp.dot(y.astype(jnp.bfloat16), ut_ref[...],
                     preferred_element_type=jnp.float32)          # (c_tile, HW)
        o_ref[0] = up.astype(o_ref.dtype)


# ------------------------------ pallas_call setup ------------------------------

def _pick_vmem_limit(per_step_bytes: int) -> int:
    """Scoped VMEM limit from the actual working set, capped at 75% of physical
    VMEM (<=48 MiB on v7x, <=96 MiB on v5e/v6e) instead of a hardcoded 32 MiB."""
    cap = 64 * 1024 * 1024
    try:
        cap = int(getattr(pltpu.get_tpu_info(), "vmem_capacity_bytes", cap))
    except Exception:
        pass
    return int(min(max(2 * per_step_bytes, 32 * 1024 * 1024), (3 * cap) // 4))


def _build_ppm_call(N, Cin, HW, S, BCred, k_chunk, c_tile, out_dtype,
                    vmem_limit, cost, single_buffer_constants):
    n_k = Cin // k_chunk
    n_c = BCred // c_tile
    const_kwargs = (
        dict(pipeline_mode=pl.Buffered(1)) if single_buffer_constants else {})
    return pl.pallas_call(
        _ppm_branch_kernel,
        out_shape=jax.ShapeDtypeStruct((N, BCred, HW), out_dtype),
        grid=(N, n_c, n_k),
        in_specs=[
            pl.BlockSpec((1, k_chunk, HW), lambda n, c, k: (n, k, 0)),   # x chunk
            pl.BlockSpec((c_tile, k_chunk), lambda n, c, k: (c, k)),     # folded W
            pl.BlockSpec((S, HW), lambda n, c, k: (0, 0), **const_kwargs),  # pool kron
            pl.BlockSpec((S, HW), lambda n, c, k: (0, 0), **const_kwargs),  # upsample kron
            pl.BlockSpec((c_tile, S), lambda n, c, k: (c, 0)),           # 0/1 mask
            pl.BlockSpec((c_tile, S), lambda n, c, k: (c, 0)),           # bias*mask
        ],
        out_specs=pl.BlockSpec((1, c_tile, HW), lambda n, c, k: (n, c, 0)),
        scratch_shapes=[pltpu.VMEM((c_tile, S), jnp.float32)],
        compiler_params=pltpu.CompilerParams(
            dimension_semantics=("parallel", "parallel", "arbitrary"),
            vmem_limit_bytes=vmem_limit),
        cost_estimate=cost,
    )


def ppm_forward(x, fused_params, *, k_chunk=None, c_tile=None):
    """Fused PPM forward. Returns (N, Cin + B*Cred, H, W)."""
    kt_all, ut_all, w_all, mask, bmask = fused_params
    N, Cin, H, W = x.shape
    HW = H * W
    S = kt_all.shape[0]
    BCred = w_all.shape[0]
    itemsize = x.dtype.itemsize

    # TODO(synk): pad W so H*W is a 128-multiple (lane-dense stores) and crop after.
    assert HW % 128 == 0, "H*W must be a multiple of 128 (pad on host otherwise)"

    if k_chunk is None:
        k_chunk = Cin if Cin <= 256 else 256
    if c_tile is None:
        c_tile = BCred if BCred <= 512 else 512
    assert Cin % k_chunk == 0 and (k_chunk == Cin or k_chunk % 128 == 0)
    assert BCred % c_tile == 0 and (c_tile == BCred or c_tile % 8 == 0)
    n_c = BCred // c_tile

    x_flat = x.reshape(N, Cin, HW)        # free view of contiguous NCHW

    # Per-grid-step VMEM working set (double-buffered pipelined operands,
    # single-buffered constants, f32 accumulator scratch).
    per_step = (
        2 * k_chunk * HW * itemsize          # x chunk
        + 2 * c_tile * k_chunk * 2           # W chunk (bf16)
        + 2 * S * HW * 2                     # kt + ut (bf16, single buffer)
        + 2 * 2 * c_tile * S * 4             # mask + bias*mask
        + 2 * c_tile * HW * itemsize         # output tile
        + c_tile * S * 4                     # accumulator
    )
    vmem_limit = _pick_vmem_limit(per_step)

    flops = 2 * N * (Cin * HW * S + BCred * Cin * S + BCred * S * HW)
    bytes_accessed = int(
        x_flat.size * itemsize * n_c
        + N * BCred * HW * itemsize
        + (kt_all.size + ut_all.size + w_all.size) * 2
        + (mask.size + bmask.size) * 4)
    cost = pl.CostEstimate(flops=flops, transcendentals=0,
                           bytes_accessed=bytes_accessed)

    args = (x_flat, w_all, kt_all, ut_all, mask, bmask)
    try:
        branch = _build_ppm_call(N, Cin, HW, S, BCred, k_chunk, c_tile,
                                 x.dtype, vmem_limit, cost, True)(*args)
    except Exception:
        # Fallback if pl.Buffered(1) single-buffering is unsupported in this build.
        branch = _build_ppm_call(N, Cin, HW, S, BCred, k_chunk, c_tile,
                                 x.dtype, vmem_limit, cost, False)(*args)

    # torch.cat([x] + branches, dim=1): x passthrough stays in XLA (review item:
    # keeps the kernel's output VMEM block to the branch channels only).
    out = jnp.concatenate([x_flat, branch], axis=1)
    return out.reshape(N, Cin + BCred, H, W)


# ------------------------------ parameter setup -------------------------------

def make_ppm_params(key, in_dim, reduction_dim, bins, eps=1e-5):
    """Deterministic synthetic per-branch parameters (conv W, BN scale, BN bias)."""
    params = []
    for i, _bin in enumerate(bins):
        k = jax.random.fold_in(key, i)
        # Conv2d(in_dim, reduction_dim, kernel_size=1, bias=False) weight
        w = jax.random.normal(k, (reduction_dim, in_dim), dtype=jnp.float32) * 0.1
        # BatchNorm2d (inference mode), deterministic but non-trivial.
        gamma = 1.0 + 0.05 * jnp.arange(reduction_dim, dtype=jnp.float32)
        beta = 0.02 * jnp.arange(reduction_dim, dtype=jnp.float32)
        running_mean = jnp.zeros((reduction_dim,), jnp.float32)
        running_var = jnp.ones((reduction_dim,), jnp.float32)
        scale = gamma / jnp.sqrt(running_var + eps)
        bias = beta - running_mean * scale
        params.append((w, scale, bias))
    return params


def build_fused_ppm_params(params, bins, H, W):
    """Stack per-branch params into the fused kernel operands (bf16 weights)."""
    Cred = params[0][0].shape[0]
    kts, uts, ws, biases = [], [], [], []
    for bin_size, (w, scale, bias) in zip(bins, params):
        ph = _adaptive_pool_matrix(H, bin_size)
        pw = _adaptive_pool_matrix(W, bin_size)
        uh = _bilinear_upsample_matrix(H, bin_size)
        uw = _bilinear_upsample_matrix(W, bin_size)
        kts.append(np.kron(ph, pw))                     # (b*b, HW) lane-dense
        uts.append(np.kron(uh, uw).T)                   # (b*b, HW) lane-dense
        ws.append(np.asarray(scale)[:, None] * np.asarray(w))  # fold BN scale
        biases.append(np.asarray(bias))
    S = sum(b * b for b in bins)
    BCred = len(bins) * Cred
    kt_all = jnp.asarray(np.concatenate(kts, axis=0), dtype=jnp.bfloat16)  # (S, HW)
    ut_all = jnp.asarray(np.concatenate(uts, axis=0), dtype=jnp.bfloat16)  # (S, HW)
    w_all = jnp.asarray(np.concatenate(ws, axis=0), dtype=jnp.bfloat16)    # (BCred, Cin)
    mask = np.zeros((BCred, S), np.float32)
    bmask = np.zeros((BCred, S), np.float32)
    off = 0
    for i, b in enumerate(bins):
        mask[i * Cred:(i + 1) * Cred, off:off + b * b] = 1.0
        bmask[i * Cred:(i + 1) * Cred, off:off + b * b] = biases[i][:, None]
        off += b * b
    return kt_all, ut_all, w_all, jnp.asarray(mask), jnp.asarray(bmask)


# --------------------------------- reference -----------------------------------

def _ppm_forward_ref(x, params, bins):
    """Pure-JAX f32 reference (same math, no Pallas) for a correctness check."""
    _, _, H, W = x.shape
    outs = [x]
    for bin_size, (w, scale, bias) in zip(bins, params):
        ph = jnp.asarray(_adaptive_pool_matrix(H, bin_size))
        pw = jnp.asarray(_adaptive_pool_matrix(W, bin_size))
        uh = jnp.asarray(_bilinear_upsample_matrix(H, bin_size))
        uw = jnp.asarray(_bilinear_upsample_matrix(W, bin_size))
        pooled = jnp.einsum('bh,nchw,dw->ncbd', ph, x, pw)
        y = jnp.einsum('oc,ncbd->nobd', w, pooled)
        y = y * scale[None, :, None, None] + bias[None, :, None, None]
        y = jnp.maximum(y, 0.0)
        up = jnp.einsum('ib,nobd,jd->noij', uh, y, uw)
        outs.append(up)
    return jnp.concatenate(outs, axis=1)


if __name__ == "__main__":
    # Small shapes consistent with the module: classic PSPNet bins (1, 2, 3, 6),
    # in_dim=256 / reduction_dim=4 (small stand-ins for 2048/512) chosen so the
    # Cin-chunk accumulator (2 chunks of 128) and the output-channel parallel
    # axis (2 tiles of 8) are genuinely exercised. Input (N=2, C=256, H=16, W=16).
    key = jax.random.PRNGKey(0)
    in_dim, reduction_dim = 256, 4
    bins = (1, 2, 3, 6)
    N, H, W = 2, 16, 16

    kx, kp = jax.random.split(key)
    x = jax.random.normal(kx, (N, in_dim, H, W), dtype=jnp.float32)
    params = make_ppm_params(kp, in_dim, reduction_dim, bins)
    fused = build_fused_ppm_params(params, bins, H, W)

    out = ppm_forward(x, fused, k_chunk=128, c_tile=8)
    out = jax.block_until_ready(out)

    expected_channels = in_dim + reduction_dim * len(bins)
    assert out.shape == (N, expected_channels, H, W), out.shape

    ref = jax.block_until_ready(_ppm_forward_ref(x, params, bins))
    # bf16 MXU operands vs f32 reference -> relaxed tolerance.
    np.testing.assert_allclose(np.asarray(out), np.asarray(ref), atol=5e-2, rtol=5e-2)

    print("KERNEL_OK")
</pallas_src>

<mosaic_0001>
module attributes {stable_mosaic.version = 11 : i64} {
  func.func @_ppm_branch_kernel(%arg0: i32, %arg1: i32, %arg2: i32, %arg3: memref<1x128x256xf32, #tpu.memory_space<vmem>>, %arg4: memref<8x128xbf16, #tpu.memory_space<vmem>>, %arg5: memref<50x256xbf16, #tpu.memory_space<vmem>>, %arg6: memref<50x256xbf16, #tpu.memory_space<vmem>>, %arg7: memref<8x50xf32, #tpu.memory_space<vmem>>, %arg8: memref<8x50xf32, #tpu.memory_space<vmem>>, %arg9: memref<1x8x256xf32, #tpu.memory_space<vmem>>, %arg10: memref<8x50xf32, #tpu.memory_space<vmem>>) attributes {dimension_semantics = [#tpu.dimension_semantics<parallel>, #tpu.dimension_semantics<parallel>, #tpu.dimension_semantics<arbitrary>], iteration_bounds = array<i64: 2, 2, 2>, scalar_prefetch = 0 : i64, scratch_operands = 1 : i64, tpu.core_type = #tpu.core_type<tc>, window_params = [{transform_indices = @transform_0, window_bounds = array<i64: 1, 128, 256>}, {transform_indices = @transform_1, window_bounds = array<i64: 8, 128>}, {pipeline_mode = #tpu.pipeline_mode<synchronous>, transform_indices = @transform_2, window_bounds = array<i64: 50, 256>}, {pipeline_mode = #tpu.pipeline_mode<synchronous>, transform_indices = @transform_3, window_bounds = array<i64: 50, 256>}, {transform_indices = @transform_4, window_bounds = array<i64: 8, 50>}, {transform_indices = @transform_5, window_bounds = array<i64: 8, 50>}, {transform_indices = @transform_6, window_bounds = array<i64: 1, 8, 256>}]} {
    %c0_i32 = arith.constant 0 : i32
    %0 = arith.cmpi eq, %arg2, %c0_i32 : i32
    %1 = arith.extui %0 : i1 to i32
    %c0_i32_0 = arith.constant 0 : i32
    %2 = arith.cmpi ne, %1, %c0_i32_0 : i32
    scf.if %2 {
      %cst_13 = arith.constant 0.000000e+00 : f32
      %17 = vector.broadcast %cst_13 : f32 to vector<8x50xf32>
      %c0_14 = arith.constant 0 : index
      %c0_15 = arith.constant 0 : index
      %18 = vector.load %arg10[%c0_14, %c0_15] : memref<8x50xf32, #tpu.memory_space<vmem>>, vector<8x50xf32>
      tpu.vector_store %arg10[%c0_14, %c0_15], %17 {strides = array<i32>} : memref<8x50xf32, #tpu.memory_space<vmem>>, vector<8x50xf32>,
    } else {
    }
    %c0 = arith.constant 0 : index
    %c0_1 = arith.constant 0 : index
    %c0_2 = arith.constant 0 : index
    %3 = vector.load %arg3[%c0, %c0_1, %c0_2] : memref<1x128x256xf32, #tpu.memory_space<vmem>>, vector<1x128x256xf32>
    %4 = vector.shape_cast %3 : vector<1x128x256xf32> to vector<128x256xf32>
    %5 = arith.truncf %4 : vector<128x256xf32> to vector<128x256xbf16>
    %c0_3 = arith.constant 0 : index
    %c0_4 = arith.constant 0 : index
    %6 = vector.load %arg5[%c0_3, %c0_4] : memref<50x256xbf16, #tpu.memory_space<vmem>>, vector<50x256xbf16>
    %cst = arith.constant dense<0.000000e+00> : vector<128x50xf32>
    %7 = tpu.matmul %5, %6, %cst {dimension_numbers = #tpu.dot_dimension_numbers<[1], [1], [0], [0], [0, 0, 1, 0], [], []>} : vector<128x256xbf16>, vector<50x256xbf16>, vector<128x50xf32> -> vector<128x50xf32>
    %c0_5 = arith.constant 0 : index
    %c0_6 = arith.constant 0 : index
    %8 = vector.load %arg10[%c0_5, %c0_6] : memref<8x50xf32, #tpu.memory_space<vmem>>, vector<8x50xf32>
    %c0_7 = arith.constant 0 : index
    %c0_8 = arith.constant 0 : index
    %9 = vector.load %arg4[%c0_7, %c0_8] : memref<8x128xbf16, #tpu.memory_space<vmem>>, vector<8x128xbf16>
    %10 = arith.truncf %7 : vector<128x50xf32> to vector<128x50xbf16>
    %cst_9 = arith.constant dense<0.000000e+00> : vector<8x50xf32>
    %11 = tpu.matmul %9, %10, %cst_9 {dimension_numbers = #tpu.dot_dimension_numbers<[1], [0], [0], [1], [0, 0, 1, 1], [], []>} : vector<8x128xbf16>, vector<128x50xbf16>, vector<8x50xf32> -> vector<8x50xf32>
    %12 = arith.addf %8, %11 : vector<8x50xf32>
    %c0_10 = arith.constant 0 : index
    %c0_11 = arith.constant 0 : index
    %13 = vector.load %arg10[%c0_10, %c0_11] : memref<8x50xf32, #tpu.memory_space<vmem>>, vector<8x50xf32>
    tpu.vector_store %arg10[%c0_10, %c0_11], %12 {strides = array<i32>} : memref<8x50xf32, #tpu.memory_space<vmem>>, vector<8x50xf32>,
    %c1_i32 = arith.constant 1 : i32
    %14 = arith.cmpi eq, %arg2, %c1_i32 : i32
    %15 = arith.extui %14 : i1 to i32
    %c0_i32_12 = arith.constant 0 : i32
    %16 = arith.cmpi ne, %15, %c0_i32_12 : i32
    scf.if %16 {
      %c0_13 = arith.constant 0 : index
      %c0_14 = arith.constant 0 : index
      %17 = vector.load %arg10[%c0_13, %c0_14] : memref<8x50xf32, #tpu.memory_space<vmem>>, vector<8x50xf32>
      %c0_15 = arith.constant 0 : index
      %c0_16 = arith.constant 0 : index
      %18 = vector.load %arg7[%c0_15, %c0_16] : memref<8x50xf32, #tpu.memory_space<vmem>>, vector<8x50xf32>
      %19 = arith.mulf %17, %18 : vector<8x50xf32>
      %c0_17 = arith.constant 0 : index
      %c0_18 = arith.constant 0 : index
      %20 = vector.load %arg8[%c0_17, %c0_18] : memref<8x50xf32, #tpu.memory_space<vmem>>, vector<8x50xf32>
      %21 = arith.addf %19, %20 : vector<8x50xf32>
      %cst_19 = arith.constant 0.000000e+00 : f32
      %22 = vector.broadcast %cst_19 : f32 to vector<8x50xf32>
      %23 = arith.maximumf %21, %22 : vector<8x50xf32>
      %24 = arith.truncf %23 : vector<8x50xf32> to vector<8x50xbf16>
      %c0_20 = arith.constant 0 : index
      %c0_21 = arith.constant 0 : index
      %25 = vector.load %arg6[%c0_20, %c0_21] : memref<50x256xbf16, #tpu.memory_space<vmem>>, vector<50x256xbf16>
      %cst_22 = arith.constant dense<0.000000e+00> : vector<8x256xf32>
      %26 = tpu.matmul %24, %25, %cst_22 {dimension_numbers = #tpu.dot_dimension_numbers<[1], [0], [0], [1], [0, 0, 1, 1], [], []>} : vector<8x50xbf16>, vector<50x256xbf16>, vector<8x256xf32> -> vector<8x256xf32>
      %c0_23 = arith.constant 0 : index
      %c0_24 = arith.constant 0 : index
      %c0_25 = arith.constant 0 : index
      %27 = vector.load %arg9[%c0_23, %c0_24, %c0_25] : memref<1x8x256xf32, #tpu.memory_space<vmem>>, vector<1x8x256xf32>
      %28 = vector.shape_cast %27 : vector<1x8x256xf32> to vector<8x256xf32>
      %29 = vector.shape_cast %26 : vector<8x256xf32> to vector<1x8x256xf32>
      tpu.vector_store %arg9[%c0_23, %c0_24, %c0_25], %29 {strides = array<i32>} : memref<1x8x256xf32, #tpu.memory_space<vmem>>, vector<1x8x256xf32>,
    } else {
    }
    return
  }
  func.func @transform_0(%arg0: i32, %arg1: i32, %arg2: i32) -> (i32, i32, i32) {
    %c0_i32 = arith.constant 0 : i32
    %c0_i32_0 = arith.constant 0 : i32
    return %arg0, %arg2, %c0_i32 : i32, i32, i32
  }
  func.func @transform_1(%arg0: i32, %arg1: i32, %arg2: i32) -> (i32, i32) {
    %c0_i32 = arith.constant 0 : i32
    return %arg1, %arg2 : i32, i32
  }
  func.func @transform_2(%arg0: i32, %arg1: i32, %arg2: i32) -> (i32, i32) {
    %c0_i32 = arith.constant 0 : i32
    %c0_i32_0 = arith.constant 0 : i32
    %c0_i32_1 = arith.constant 0 : i32
    return %c0_i32, %c0_i32_0 : i32, i32
  }
  func.func @transform_3(%arg0: i32, %arg1: i32, %arg2: i32) -> (i32, i32) {
    %c0_i32 = arith.constant 0 : i32
    %c0_i32_0 = arith.constant 0 : i32
    %c0_i32_1 = arith.constant 0 : i32
    return %c0_i32, %c0_i32_0 : i32, i32
  }
  func.func @transform_4(%arg0: i32, %arg1: i32, %arg2: i32) -> (i32, i32) {
    %c0_i32 = arith.constant 0 : i32
    %c0_i32_0 = arith.constant 0 : i32
    return %arg1, %c0_i32 : i32, i32
  }
  func.func @transform_5(%arg0: i32, %arg1: i32, %arg2: i32) -> (i32, i32) {
    %c0_i32 = arith.constant 0 : i32
    %c0_i32_0 = arith.constant 0 : i32
    return %arg1, %c0_i32 : i32, i32
  }
  func.func @transform_6(%arg0: i32, %arg1: i32, %arg2: i32) -> (i32, i32, i32) {
    %c0_i32 = arith.constant 0 : i32
    %c0_i32_0 = arith.constant 0 : i32
    return %arg0, %arg1, %c0_i32 : i32, i32, i32
  }
}

module attributes {stable_mosaic.version = 11 : i64} {
  func.func @_ppm_branch_kernel(%arg0: i32, %arg1: i32, %arg2: i32, %arg3: memref<1x128x256xf32, #tpu.memory_space<vmem>>, %arg4: memref<8x128xbf16, #tpu.memory_space<vmem>>, %arg5: memref<50x256xbf16, #tpu.memory_space<vmem>>, %arg6: memref<50x256xbf16, #tpu.memory_space<vmem>>, %arg7: memref<8x50xf32, #tpu.memory_space<vmem>>, %arg8: memref<8x50xf32, #tpu.memory_space<vmem>>, %arg9: memref<1x8x256xf32, #tpu.memory_space<vmem>>, %arg10: memref<8x50xf32, #tpu.memory_space<vmem>>) attributes {dimension_semantics = [#tpu.dimension_semantics<parallel>, #tpu.dimension_semantics<parallel>, #tpu.dimension_semantics<arbitrary>], iteration_bounds = array<i64: 2, 2, 2>, scalar_prefetch = 0 : i64, scratch_operands = 1 : i64, tpu.core_type = #tpu.core_type<tc>, window_params = [{transform_indices = @transform_0, window_bounds = array<i64: 1, 128, 256>}, {transform_indices = @transform_1, window_bounds = array<i64: 8, 128>}, {pipeline_mode = #tpu.pipeline_mode<synchronous>, transform_indices = @transform_2, window_bounds = array<i64: 50, 256>}, {pipeline_mode = #tpu.pipeline_mode<synchronous>, transform_indices = @transform_3, window_bounds = array<i64: 50, 256>}, {transform_indices = @transform_4, window_bounds = array<i64: 8, 50>}, {transform_indices = @transform_5, window_bounds = array<i64: 8, 50>}, {transform_indices = @transform_6, window_bounds = array<i64: 1, 8, 256>}]} {
    %c0_i32 = arith.constant 0 : i32
    %0 = arith.cmpi eq, %arg2, %c0_i32 : i32
    %1 = arith.extui %0 : i1 to i32
    %c0_i32_0 = arith.constant 0 : i32
    %2 = arith.cmpi ne, %1, %c0_i32_0 : i32
    scf.if %2 {
      %cst_13 = arith.constant 0.000000e+00 : f32
      %17 = vector.broadcast %cst_13 : f32 to vector<8x50xf32>
      %c0_14 = arith.constant 0 : index
      %c0_15 = arith.constant 0 : index
      %18 = vector.load %arg10[%c0_14, %c0_15] : memref<8x50xf32, #tpu.memory_space<vmem>>, vector<8x50xf32>
      tpu.vector_store %arg10[%c0_14, %c0_15], %17 {strides = array<i32>} : memref<8x50xf32, #tpu.memory_space<vmem>>, vector<8x50xf32>,
    } else {
    }
    %c0 = arith.constant 0 : index
    %c0_1 = arith.constant 0 : index
    %c0_2 = arith.constant 0 : index
    %3 = vector.load %arg3[%c0, %c0_1, %c0_2] : memref<1x128x256xf32, #tpu.memory_space<vmem>>, vector<1x128x256xf32>
    %4 = vector.shape_cast %3 : vector<1x128x256xf32> to vector<128x256xf32>
    %5 = arith.truncf %4 : vector<128x256xf32> to vector<128x256xbf16>
    %c0_3 = arith.constant 0 : index
    %c0_4 = arith.constant 0 : index
    %6 = vector.load %arg5[%c0_3, %c0_4] : memref<50x256xbf16, #tpu.memory_space<vmem>>, vector<50x256xbf16>
    %cst = arith.constant dense<0.000000e+00> : vector<128x50xf32>
    %7 = tpu.matmul %5, %6, %cst {dimension_numbers = #tpu.dot_dimension_numbers<[1], [1], [0], [0], [0, 0, 1, 0], [], []>} : vector<128x256xbf16>, vector<50x256xbf16>, vector<128x50xf32> -> vector<128x50xf32>
    %c0_5 = arith.constant 0 : index
    %c0_6 = arith.constant 0 : index
    %8 = vector.load %arg10[%c0_5, %c0_6] : memref<8x50xf32, #tpu.memory_space<vmem>>, vector<8x50xf32>
    %c0_7 = arith.constant 0 : index
    %c0_8 = arith.constant 0 : index
    %9 = vector.load %arg4[%c0_7, %c0_8] : memref<8x128xbf16, #tpu.memory_space<vmem>>, vector<8x128xbf16>
    %10 = arith.truncf %7 : vector<128x50xf32> to vector<128x50xbf16>
    %cst_9 = arith.constant dense<0.000000e+00> : vector<8x50xf32>
    %11 = tpu.matmul %9, %10, %cst_9 {dimension_numbers = #tpu.dot_dimension_numbers<[1], [0], [0], [1], [0, 0, 1, 1], [], []>} : vector<8x128xbf16>, vector<128x50xbf16>, vector<8x50xf32> -> vector<8x50xf32>
    %12 = arith.addf %8, %11 : vector<8x50xf32>
    %c0_10 = arith.constant 0 : index
    %c0_11 = arith.constant 0 : index
    %13 = vector.load %arg10[%c0_10, %c0_11] : memref<8x50xf32, #tpu.memory_space<vmem>>, vector<8x50xf32>
    tpu.vector_store %arg10[%c0_10, %c0_11], %12 {strides = array<i32>} : memref<8x50xf32, #tpu.memory_space<vmem>>, vector<8x50xf32>,
    %c1_i32 = arith.constant 1 : i32
    %14 = arith.cmpi eq, %arg2, %c1_i32 : i32
    %15 = arith.extui %14 : i1 to i32
    %c0_i32_12 = arith.constant 0 : i32
    %16 = arith.cmpi ne, %15, %c0_i32_12 : i32
    scf.if %16 {
      %c0_13 = arith.constant 0 : index
      %c0_14 = arith.constant 0 : index
      %17 = vector.load %arg10[%c0_13, %c0_14] : memref<8x50xf32, #tpu.memory_space<vmem>>, vector<8x50xf32>
      %c0_15 = arith.constant 0 : index
      %c0_16 = arith.constant 0 : index
      %18 = vector.load %arg7[%c0_15, %c0_16] : memref<8x50xf32, #tpu.memory_space<vmem>>, vector<8x50xf32>
      %19 = arith.mulf %17, %18 : vector<8x50xf32>
      %c0_17 = arith.constant 0 : index
      %c0_18 = arith.constant 0 : index
      %20 = vector.load %arg8[%c0_17, %c0_18] : memref<8x50xf32, #tpu.memory_space<vmem>>, vector<8x50xf32>
      %21 = arith.addf %19, %20 : vector<8x50xf32>
      %cst_19 = arith.constant 0.000000e+00 : f32
      %22 = vector.broadcast %cst_19 : f32 to vector<8x50xf32>
      %23 = arith.maximumf %21, %22 : vector<8x50xf32>
      %24 = arith.truncf %23 : vector<8x50xf32> to vector<8x50xbf16>
      %c0_20 = arith.constant 0 : index
      %c0_21 = arith.constant 0 : index
      %25 = vector.load %arg6[%c0_20, %c0_21] : memref<50x256xbf16, #tpu.memory_space<vmem>>, vector<50x256xbf16>
      %cst_22 = arith.constant dense<0.000000e+00> : vector<8x256xf32>
      %26 = tpu.matmul %24, %25, %cst_22 {dimension_numbers = #tpu.dot_dimension_numbers<[1], [0], [0], [1], [0, 0, 1, 1], [], []>} : vector<8x50xbf16>, vector<50x256xbf16>, vector<8x256xf32> -> vector<8x256xf32>
      %c0_23 = arith.constant 0 : index
      %c0_24 = arith.constant 0 : index
      %c0_25 = arith.constant 0 : index
      %27 = vector.load %arg9[%c0_23, %c0_24, %c0_25] : memref<1x8x256xf32, #tpu.memory_space<vmem>>, vector<1x8x256xf32>
      %28 = vector.shape_cast %27 : vector<1x8x256xf32> to vector<8x256xf32>
      %29 = vector.shape_cast %26 : vector<8x256xf32> to vector<1x8x256xf32>
      tpu.vector_store %arg9[%c0_23, %c0_24, %c0_25], %29 {strides = array<i32>} : memref<1x8x256xf32, #tpu.memory_space<vmem>>, vector<1x8x256xf32>,
    } else {
    }
    return
  }
  func.func @transform_0(%arg0: i32, %arg1: i32, %arg2: i32) -> (i32, i32, i32) {
    %c0_i32 = arith.constant 0 : i32
    %c0_i32_0 = arith.constant 0 : i32
    return %arg0, %arg2, %c0_i32 : i32, i32, i32
  }
  func.func @transform_1(%arg0: i32, %arg1: i32, %arg2: i32) -> (i32, i32) {
    %c0_i32 = arith.constant 0 : i32
    return %arg1, %arg2 : i32, i32
  }
  func.func @transform_2(%arg0: i32, %arg1: i32, %arg2: i32) -> (i32, i32) {
    %c0_i32 = arith.constant 0 : i32
    %c0_i32_0 = arith.constant 0 : i32
    %c0_i32_1 = arith.constant 0 : i32
    return %c0_i32, %c0_i32_0 : i32, i32
  }
  func.func @transform_3(%arg0: i32, %arg1: i32, %arg2: i32) -> (i32, i32) {
    %c0_i32 = arith.constant 0 : i32
    %c0_i32_0 = arith.constant 0 : i32
    %c0_i32_1 = arith.constant 0 : i32
    return %c0_i32, %c0_i32_0 : i32, i32
  }
  func.func @transform_4(%arg0: i32, %arg1: i32, %arg2: i32) -> (i32, i32) {
    %c0_i32 = arith.constant 0 : i32
    %c0_i32_0 = arith.constant 0 : i32
    return %arg1, %c0_i32 : i32, i32
  }
  func.func @transform_5(%arg0: i32, %arg1: i32, %arg2: i32) -> (i32, i32) {
    %c0_i32 = arith.constant 0 : i32
    %c0_i32_0 = arith.constant 0 : i32
    return %arg1, %c0_i32 : i32, i32
  }
  func.func @transform_6(%arg0: i32, %arg1: i32, %arg2: i32) -> (i32, i32, i32) {
    %c0_i32 = arith.constant 0 : i32
    %c0_i32_0 = arith.constant 0 : i32
    return %arg0, %arg1, %c0_i32 : i32, i32, i32
  }
}

</mosaic_0001>

<llo_original>
// kernel: tpu_custom_call.1
$region0: #{tpu_custom_call.1}
  #allocation0 [shape = 'u32[]', space=smem, size = 0x4, offset = 0x4, fixed_abs, tag = 'smem constant byte address 0x4 - core index']
  #allocation1 [shape = 'u32[144,128]{1,0:T(1,128)}', space=vmem, size = 0x12000, scoped, tag = 'internal scratch']
  #allocation2 [shape = 'f32[8,50]{1,0:T(8,128)}', space=vmem, size = 0x1000, scoped, tag = 'scratch operand']
  %s0 = inlined_call_operand.hbm [shape: f32[2,256,256], index: 0, kind: input, shape index: {}]
  %s1 = inlined_call_operand.hbm [shape: bf16[16,256], index: 1, kind: input, shape index: {}]
  %s2 = inlined_call_operand.hbm [shape: bf16[50,256], index: 2, kind: input, shape index: {}]
  %s3 = inlined_call_operand.hbm [shape: bf16[50,256], index: 3, kind: input, shape index: {}]
  %s4 = inlined_call_operand.hbm [shape: f32[16,50], index: 4, kind: input, shape index: {}]
  %s5 = inlined_call_operand.vmem [shape: f32[16,50], index: 5, kind: input, shape index: {}]
  %s6 = inlined_call_operand.hbm [shape: f32[2,16,256], index: 6, kind: output, shape index: {}]
  %s7 = sld [smem:[#allocation0]]
  $region85: #{tpu_custom_call.1} parent=0
    _
  %s9 = ssub.s32 1, %s7
  %s10 = scalar_select 0, %s9, %s7
  $region1: #{tpu_custom_call.1} parent=0
    #allocation3 [shape = 'u8[262144]{0}', space=vmem, size = 0x40000, scoped, tag = 'input window, operand 0']
    #allocation4 [shape = 's32[2]{0}', space=sflag, size = 0x8, scoped, tag = 'scoped memory for tpu_custom_call.1']
    #allocation5 [shape = 's32[2]{0}', space=sflag, size = 0x8, scoped, tag = 'scoped memory for tpu_custom_call.1']
    #allocation6 [shape = 'u8[4096]{0}', space=vmem, size = 0x1000, scoped, tag = 'input window, operand 1']
    #allocation7 [shape = 's32[2]{0}', space=sflag, size = 0x8, scoped, tag = 'scoped memory for tpu_custom_call.1']
    #allocation8 [shape = 'u8[28672]{0}', space=vmem, size = 0x7000, scoped, tag = 'input window, operand 2, single buffered']
    #allocation9 [shape = 'u8[28672]{0}', space=vmem, size = 0x7000, scoped, tag = 'input window, operand 3, single buffered']
    #allocation10 [shape = 's32[1]{0}', space=sflag, size = 0x4, scoped, tag = 'scoped memory for tpu_custom_call.1']
    #allocation11 [shape = 'u8[8192]{0}', space=vmem, size = 0x2000, scoped, tag = 'input window, operand 4']
    #allocation12 [shape = 'u8[16384]{0}', space=vmem, size = 0x4000, scoped, tag = 'output window, operand 0']
    %11 = vsyncpa [#allocation4], 0
    %s12 = scalar_lea.sflag [#allocation4], 1
    %13 = vsyncpa %s12, 0
    %14 = vsyncpa [#allocation7], 0
    %s15 = scalar_lea.sflag [#allocation7], 1
    %16 = vsyncpa %s15, 0
    %17 = vsyncpa [#allocation10], 0
    %18 = vsyncpa [#allocation5], 0
    %s19 = scalar_lea.sflag [#allocation5], 1
    %20 = vsyncpa %s19, 0
    loop: start=0, step=1, limit=10
    $region2: #{tpu_custom_call.1} parent=1 // loop_pre_header
      _
    $region3: #{tpu_custom_call.1} parent=1 // loop_header
      %s22 = sphi 0, %s26
      %p23 = scmp.ge.s32.totalorder %s22, 10
      %s29 = sphi 0, %s48
      %s30 = sphi 0, %s44
      %s31 = sphi 0, %s40
      %s32 = sphi 0, %s29
      %s33 = sphi 0, %s30
      %s34 = sphi 0, %s31
      %s35 = sphi 0, %s32
      %s36 = sphi 0, %s33
      %s37 = sphi 0, %s34
      %s53 = sphi 0, %s55
      %s56 = sphi 0, %s53
      %s57 = sphi 0, %s56
      %s73 = sphi 0, %s57
      %s81 = sphi 0, %s83
      %s84 = sphi 0, %s81
      %s85 = sphi 0, %s84
      %s101 = sphi 0, %s85
      %s105 = sphi 0, %s105
      %s107 = sphi 0, %s105
      %s108 = sphi 0, %s107
      %s122 = sphi 0, %s108
      %s126 = sphi 0, %s126
      %s128 = sphi 0, %s126
      %s129 = sphi 0, %s128
      %s143 = sphi 0, %s129
      %s149 = sphi 0, %s151
      %s152 = sphi 0, %s149
      %s153 = sphi 0, %s152
      %s169 = sphi 0, %s153
      %s175 = sphi 0, %s177
      %s178 = sphi 0, %s175
      %s179 = sphi 0, %s178
      %s195 = sphi 0, %s179
      %s203 = sphi 0, %s205
      %s206 = sphi 0, %s203
      %s207 = sphi 0, %s206
      %s223 = sphi 0, %s207
    $region4: #{tpu_custom_call.1} parent=1 // loop_header_branch
      %25 = sbr.rel (%p23) target = $region8
    $region5: #{tpu_custom_call.1} parent=1 // loop_body
      %s27 = ssub.s32 %s22, 1
      %s28 = ssub.s32 %s22, 2
      %s38 = sadd.s32 1, %s31
      %p39 = scmp.ge.s32.totalorder %s38, 2
      %s40 = scalar_select %p39, 0, %s38
      %s41 = sadd.s32 1, %s30
      %s42 = scalar_select %p39, %s41, %s30
      %p43 = scmp.ge.s32.totalorder %s42, 2
      %s44 = scalar_select %p43, 0, %s42
      %s45 = sadd.s32 1, %s29
      %s46 = scalar_select %p43, %s45, %s29
      %p47 = scmp.ge.s32.totalorder %s46, 2
      %s48 = scalar_select %p47, 0, %s46
      %s49 = ssub.s32 %s29, %s48
      %s50 = ssub.s32 %s31, %s40
      %s51 = sor.u32 %s49, %s50
      %p52 = scmp.eq.s32.totalorder %s51, 0
      %s54 = sadd.s32 %s53, 1
      %s55 = scalar_select %p52, %s53, %s54
      %p58 = pneg %p52
      %p59 = scmp.eq.s32.totalorder %s22, 7
      %p60 = por %p58, %p59
      %p61 = scmp.ne.s32.totalorder %s53, %s56
      %p62 = scmp.eq.s32.totalorder %s22, 0
      %p63 = por %p61, %p62
      %p64 = scmp.ne.s32.totalorder %s53, %s56
      %p65 = scmp.eq.s32.totalorder %s27, 7
      %p66 = por %p64, %p65
      %p67 = scmp.ne.s32.totalorder %s56, %s57
      %p68 = scmp.eq.s32.totalorder %s27, 0
      %p69 = por %p67, %p68
      %p70 = scmp.ne.s32.totalorder %s56, %s57
      %p71 = scmp.eq.s32.totalorder %s28, 7
      %p72 = por %p70, %p71
      %p74 = scmp.ne.s32.totalorder %s57, %s73
      %p75 = scmp.eq.s32.totalorder %s28, 0
      %p76 = por %p74, %p75
      %s77 = ssub.s32 %s30, %s44
      %s78 = ssub.s32 %s31, %s40
      %s79 = sor.u32 %s77, %s78
      %p80 = scmp.eq.s32.totalorder %s79, 0
      %s82 = sadd.s32 %s81, 1
      %s83 = scalar_select %p80, %s81, %s82
      %p86 = pneg %p80
      %p87 = scmp.eq.s32.totalorder %s22, 7
      %p88 = por %p86, %p87
      %p89 = scmp.ne.s32.totalorder %s81, %s84
      %p90 = scmp.eq.s32.totalorder %s22, 0
      %p91 = por %p89, %p90
      %p92 = scmp.ne.s32.totalorder %s81, %s84
      %p93 = scmp.eq.s32.totalorder %s27, 7
      %p94 = por %p92, %p93
      %p95 = scmp.ne.s32.totalorder %s84, %s85
      %p96 = scmp.eq.s32.totalorder %s27, 0
      %p97 = por %p95, %p96
      %p98 = scmp.ne.s32.totalorder %s84, %s85
      %p99 = scmp.eq.s32.totalorder %s28, 7
      %p100 = por %p98, %p99
      %p102 = scmp.ne.s32.totalorder %s85, %s101
      %p103 = scmp.eq.s32.totalorder %s28, 0
      %p104 = por %p102, %p103
      %s106 = sadd.s32 %s105, 1
      %p109 = scmp.eq.s32.totalorder %s22, 7
      %p110 = scmp.ne.s32.totalorder %s105, %s107
      %p111 = scmp.eq.s32.totalorder %s22, 0
      %p112 = por %p110, %p111
      %p113 = scmp.ne.s32.totalorder %s105, %s107
      %p114 = scmp.eq.s32.totalorder %s27, 7
      %p115 = por %p113, %p114
      %p116 = scmp.ne.s32.totalorder %s107, %s108
      %p117 = scmp.eq.s32.totalorder %s27, 0
      %p118 = por %p116, %p117
      %p119 = scmp.ne.s32.totalorder %s107, %s108
      %p120 = scmp.eq.s32.totalorder %s28, 7
      %p121 = por %p119, %p120
      %p123 = scmp.ne.s32.totalorder %s108, %s122
      %p124 = scmp.eq.s32.totalorder %s28, 0
      %p125 = por %p123, %p124
      %s127 = sadd.s32 %s126, 1
      %p130 = scmp.eq.s32.totalorder %s22, 7
      %p131 = scmp.ne.s32.totalorder %s126, %s128
      %p132 = scmp.eq.s32.totalorder %s22, 0
      %p133 = por %p131, %p132
      %p134 = scmp.ne.s32.totalorder %s126, %s128
      %p135 = scmp.eq.s32.totalorder %s27, 7
      %p136 = por %p134, %p135
      %p137 = scmp.ne.s32.totalorder %s128, %s129
      %p138 = scmp.eq.s32.totalorder %s27, 0
      %p139 = por %p137, %p138
      %p140 = scmp.ne.s32.totalorder %s128, %s129
      %p141 = scmp.eq.s32.totalorder %s28, 7
      %p142 = por %p140, %p141
      %p144 = scmp.ne.s32.totalorder %s129, %s143
      %p145 = scmp.eq.s32.totalorder %s28, 0
      %p146 = por %p144, %p145
      %s147 = ssub.s32 %s30, %s44
      %p148 = scmp.eq.s32.totalorder %s147, 0
      %s150 = sadd.s32 %s149, 1
      %s151 = scalar_select %p148, %s149, %s150
      %p154 = pneg %p148
      %p155 = scmp.eq.s32.totalorder %s22, 7
      %p156 = por %p154, %p155
      %p157 = scmp.ne.s32.totalorder %s149, %s152
      %p158 = scmp.eq.s32.totalorder %s22, 0
      %p159 = por %p157, %p158
      %p160 = scmp.ne.s32.totalorder %s149, %s152
      %p161 = scmp.eq.s32.totalorder %s27, 7
      %p162 = por %p160, %p161
      %p163 = scmp.ne.s32.totalorder %s152, %s153
      %p164 = scmp.eq.s32.totalorder %s27, 0
      %p165 = por %p163, %p164
      %p166 = scmp.ne.s32.totalorder %s152, %s153
      %p167 = scmp.eq.s32.totalorder %s28, 7
      %p168 = por %p166, %p167
      %p170 = scmp.ne.s32.totalorder %s153, %s169
      %p171 = scmp.eq.s32.totalorder %s28, 0
      %p172 = por %p170, %p171
      %s173 = ssub.s32 %s30, %s44
      %p174 = scmp.eq.s32.totalorder %s173, 0
      %s176 = sadd.s32 %s175, 1
      %s177 = scalar_select %p174, %s175, %s176
      %p180 = pneg %p174
      %p181 = scmp.eq.s32.totalorder %s22, 7
      %p182 = por %p180, %p181
      %p183 = scmp.ne.s32.totalorder %s175, %s178
      %p184 = scmp.eq.s32.totalorder %s22, 0
      %p185 = por %p183, %p184
      %p186 = scmp.ne.s32.totalorder %s175, %s178
      %p187 = scmp.eq.s32.totalorder %s27, 7
      %p188 = por %p186, %p187
      %p189 = scmp.ne.s32.totalorder %s178, %s179
      %p190 = scmp.eq.s32.totalorder %s27, 0
      %p191 = por %p189, %p190
      %p192 = scmp.ne.s32.totalorder %s178, %s179
      %p193 = scmp.eq.s32.totalorder %s28, 7
      %p194 = por %p192, %p193
      %p196 = scmp.ne.s32.totalorder %s179, %s195
      %p197 = scmp.eq.s32.totalorder %s28, 0
      %p198 = por %p196, %p197
      %s199 = ssub.s32 %s29, %s48
      %s200 = ssub.s32 %s30, %s44
      %s201 = sor.u32 %s199, %s200
      %p202 = scmp.eq.s32.totalorder %s201, 0
      %s204 = sadd.s32 %s203, 1
      %s205 = scalar_select %p202, %s203, %s204
      %p208 = pneg %p202
      %p209 = scmp.eq.s32.totalorder %s22, 7
      %p210 = por %p208, %p209
      %p211 = scmp.ne.s32.totalorder %s203, %s206
      %p212 = scmp.eq.s32.totalorder %s22, 0
      %p213 = por %p211, %p212
      %p214 = scmp.ne.s32.totalorder %s203, %s206
      %p215 = scmp.eq.s32.totalorder %s27, 7
      %p216 = por %p214, %p215
      %p217 = scmp.ne.s32.totalorder %s206, %s207
      %p218 = scmp.eq.s32.totalorder %s27, 0
      %p219 = por %p217, %p218
      %p220 = scmp.ne.s32.totalorder %s206, %s207
      %p221 = scmp.eq.s32.totalorder %s28, 7
      %p222 = por %p220, %p221
      %p224 = scmp.ne.s32.totalorder %s207, %s223
      %p225 = scmp.eq.s32.totalorder %s28, 0
      %p226 = por %p224, %p225
      %p227 = scmp.le.s32.totalorder 1, %s22
      %p228 = scmp.lt.s32.totalorder %s22, 9
      %p229 = pnand %p227, %p228
      %p230 = pneg %p229
      // Predicated region
      $region9: #{tpu_custom_call.1} parent=5 // pred_check
        _
      $region10: #{tpu_custom_call.1} parent=5 // pred_check_branch
        %232 = sbr.rel (%p229) target = $region12
      $region11: #{tpu_custom_call.1} parent=5 // pred_region
        %s233 = ssub.s32 %s22, 1
        // Predicated region
        $region13: #{tpu_custom_call.1} parent=11 // pred_check
          %p234 = pneg %p118
        $region14: #{tpu_custom_call.1} parent=11 // pred_check_branch
          %236 = sbr.rel (%p234) target = $region16
        $region15: #{tpu_custom_call.1} parent=11 // pred_region
          %s238 = ssub.s32 896, 896
          %239 = vsyncadd [#allocation7], %s238
          %s240 = sshll.u32 [#allocation8], 4
          %s241 = int_to_ptr.vmem [resolvable:$true] %s240
          %246 = dma.hbm_to_vmem [thread:$0]  %s2, 896, %s241, [#allocation7], 128, 128, 8
        $region16: #{tpu_custom_call.1} parent=11 // pred_fallthru
          _
        // Predicated region
        $region17: #{tpu_custom_call.1} parent=11 // pred_check
          %p247 = pneg %p139
        $region18: #{tpu_custom_call.1} parent=11 // pred_check_branch
          %249 = sbr.rel (%p247) target = $region20
        $region19: #{tpu_custom_call.1} parent=11 // pred_region
          %s251 = ssub.s32 896, 896
          %252 = vsyncadd [#allocation10], %s251
          %s253 = sshll.u32 [#allocation9], 4
          %s254 = int_to_ptr.vmem [resolvable:$true] %s253
          %259 = dma.hbm_to_vmem [thread:$0]  %s3, 896, %s254, [#allocation10], 128, 128, 8
        $region20: #{tpu_custom_call.1} parent=11 // pred_fallthru
          _
      $region12: #{tpu_custom_call.1} parent=5 // pred_fallthru
        _
      %p260 = scmp.lt.s32.totalorder %s22, 8
      // Predicated region
      $region21: #{tpu_custom_call.1} parent=5 // pred_check
        %p261 = pneg %p260
      $region22: #{tpu_custom_call.1} parent=5 // pred_check_branch
        %263 = sbr.rel (%p261) target = $region24
      $region23: #{tpu_custom_call.1} parent=5 // pred_region
        // Predicated region
        $region25: #{tpu_custom_call.1} parent=23 // pred_check
          %p264 = pneg %p63
        $region26: #{tpu_custom_call.1} parent=23 // pred_check_branch
          %266 = sbr.rel (%p264) target = $region28
        $region27: #{tpu_custom_call.1} parent=23 // pred_region
          %s267 = sand.u32 %s22, 1
          %s268 = scalar_lea.sflag [#allocation4], %s267
          %s269 = sand.u32 %s53, 1
          %s270 = smul.addr %s269, 256
          %s271 = scalar_lea.vmem [#allocation3], %s270
          %s272 = smul.u32 16, %s31
          %s274 = ssub.s32 4096, 4096
          %275 = vsyncadd %s268, %s274
          %s276 = smul.addr %s272, 2
          %s277 = smul.addr %s29, 64
          %s278 = sadd.s32 %s276, %s277
          %s279 = smul.addr %s278, 128
          %s280 = scalar_lea.hbm %s0, %s279
          %s281 = sshll.u32 %s271, 4
          %s282 = int_to_ptr.vmem [resolvable:$true] %s281
          %287 = dma.hbm_to_vmem [thread:$0]  %s280, 4096, %s282, %s268, 256, 256, 16
        $region28: #{tpu_custom_call.1} parent=23 // pred_fallthru
          _
        // Predicated region
        $region29: #{tpu_custom_call.1} parent=23 // pred_check
          %p288 = pneg %p91
        $region30: #{tpu_custom_call.1} parent=23 // pred_check_branch
          %290 = sbr.rel (%p288) target = $region32
        $region31: #{tpu_custom_call.1} parent=23 // pred_region
          %s291 = sand.u32 %s22, 1
          %s292 = scalar_lea.sflag [#allocation7], %s291
          %s293 = sand.u32 %s81, 1
          %s294 = smul.addr %s293, 4
          %s295 = scalar_lea.vmem [#allocation6], %s294
          %s297 = ssub.s32 64, 64
          %298 = vsyncadd %s292, %s297
          %s299 = smul.addr %s30, 2
          %s300 = sadd.s32 %s31, %s299
          %s301 = smul.addr %s300, 64
          %s302 = scalar_lea.hbm %s1, %s301
          %s304 = sshll.u32 %s295, 4
          %s305 = int_to_ptr.vmem [resolvable:$true] %s304
          %307 = dma.hbm_to_vmem [thread:$0]  %s302, 64, %s305, %s292
        $region32: #{tpu_custom_call.1} parent=23 // pred_fallthru
          _
        // Predicated region
        $region33: #{tpu_custom_call.1} parent=23 // pred_check
          %p308 = pneg %p159
        $region34: #{tpu_custom_call.1} parent=23 // pred_check_branch
          %310 = sbr.rel (%p308) target = $region36
        $region35: #{tpu_custom_call.1} parent=23 // pred_region
          %s311 = sand.u32 %s22, 1
          %s312 = scalar_lea.sflag [#allocation4], %s311
          %s313 = sand.u32 %s149, 1
          %s314 = smul.addr %s313, 8
          %s315 = scalar_lea.vmem [#allocation11], %s314
          %s317 = ssub.s32 128, 128
          %318 = vsyncadd %s312, %s317
          %s319 = smul.addr %s30, 128
          %s320 = scalar_lea.hbm %s4, %s319
          %s322 = sshll.u32 %s315, 4
          %s323 = int_to_ptr.vmem [resolvable:$true] %s322
          %325 = dma.hbm_to_vmem [thread:$0]  %s320, 128, %s323, %s312
        $region36: #{tpu_custom_call.1} parent=23 // pred_fallthru
          _
        // Predicated region
        $region37: #{tpu_custom_call.1} parent=23 // pred_check
          %p326 = pneg %p185
        $region38: #{tpu_custom_call.1} parent=23 // pred_check_branch
          %328 = sbr.rel (%p326) target = $region40
        $region39: #{tpu_custom_call.1} parent=23 // pred_region
          %p329 = scmp.lt.s32.totalorder %s30, 1
          %s330 = scalar_select %p329, %s30, 1
          %s331 = smul.addr %s330, 8
          %s332 = scalar_lea.vmem %s5, %s331
        $region40: #{tpu_custom_call.1} parent=23 // pred_fallthru
          _
      $region24: #{tpu_custom_call.1} parent=5 // pred_fallthru
        _
      %p333 = scmp.le.s32.totalorder 1, %s22
      %p334 = scmp.lt.s32.totalorder %s22, 9
      %p335 = pnand %p333, %p334
      %p336 = pneg %p335
      // Predicated region
      $region41: #{tpu_custom_call.1} parent=5 // pred_check
        _
      $region42: #{tpu_custom_call.1} parent=5 // pred_check_branch
        %338 = sbr.rel (%p335) target = $region44
      $region43: #{tpu_custom_call.1} parent=5 // pred_region
        %s339 = ssub.s32 %s22, 1
        %s340 = sand.u32 %s27, 1
        %s341 = scalar_lea.sflag [#allocation4], %s340
        %s342 = sand.u32 %s56, 1
        %s343 = smul.addr %s342, 256
        %s344 = scalar_lea.vmem [#allocation3], %s343
        // Predicated region
        $region45: #{tpu_custom_call.1} parent=43 // pred_check
          %p345 = pneg %p69
        $region46: #{tpu_custom_call.1} parent=43 // pred_check_branch
          %347 = sbr.rel (%p345) target = $region48
        $region47: #{tpu_custom_call.1} parent=43 // pred_region
          %348 = dma.done %s341, 4096
        $region48: #{tpu_custom_call.1} parent=43 // pred_fallthru
          _
        %s349 = sand.u32 %s27, 1
        %s350 = scalar_lea.sflag [#allocation7], %s349
        %s351 = sand.u32 %s84, 1
        %s352 = smul.addr %s351, 4
        %s353 = scalar_lea.vmem [#allocation6], %s352
        // Predicated region
        $region49: #{tpu_custom_call.1} parent=43 // pred_check
          %p354 = pneg %p97
        $region50: #{tpu_custom_call.1} parent=43 // pred_check_branch
          %356 = sbr.rel (%p354) target = $region52
        $region51: #{tpu_custom_call.1} parent=43 // pred_region
          %357 = dma.done %s350, 64
        $region52: #{tpu_custom_call.1} parent=43 // pred_fallthru
          _
        // Predicated region
        $region53: #{tpu_custom_call.1} parent=43 // pred_check
          %p358 = pneg %p118
        $region54: #{tpu_custom_call.1} parent=43 // pred_check_branch
          %360 = sbr.rel (%p358) target = $region56
        $region55: #{tpu_custom_call.1} parent=43 // pred_region
          %361 = dma.done [#allocation7], 896
        $region56: #{tpu_custom_call.1} parent=43 // pred_fallthru
          _
        // Predicated region
        $region57: #{tpu_custom_call.1} parent=43 // pred_check
          %p362 = pneg %p139
        $region58: #{tpu_custom_call.1} parent=43 // pred_check_branch
          %364 = sbr.rel (%p362) target = $region60
        $region59: #{tpu_custom_call.1} parent=43 // pred_region
          %365 = dma.done [#allocation10], 896
        $region60: #{tpu_custom_call.1} parent=43 // pred_fallthru
          _
        %s366 = sand.u32 %s27, 1
        %s367 = scalar_lea.sflag [#allocation4], %s366
        %s368 = sand.u32 %s152, 1
        %s369 = smul.addr %s368, 8
        %s370 = scalar_lea.vmem [#allocation11], %s369
        // Predicated region
        $region61: #{tpu_custom_call.1} parent=43 // pred_check
          %p371 = pneg %p165
        $region62: #{tpu_custom_call.1} parent=43 // pred_check_branch
          %373 = sbr.rel (%p371) target = $region64
        $region63: #{tpu_custom_call.1} parent=43 // pred_region
          %374 = dma.done %s367, 128
        $region64: #{tpu_custom_call.1} parent=43 // pred_fallthru
          _
        %s375 = sand.u32 %s27, 1
        %s376 = scalar_lea.sflag [#allocation4], %s375
        %s377 = sand.u32 %s56, 1
        %s378 = smul.addr %s377, 256
        %s379 = scalar_lea.vmem [#allocation3], %s378
        %p380 = pneg %p69
        %p381 = pneg %p66
        %s382 = sand.u32 %s27, 1
        %s383 = scalar_lea.sflag [#allocation7], %s382
        %s384 = sand.u32 %s84, 1
        %s385 = smul.addr %s384, 4
        %s386 = scalar_lea.vmem [#allocation6], %s385
        %p387 = pneg %p97
        %p388 = pneg %p94
        %p389 = pneg %p118
        %p390 = pneg %p115
        %p391 = pneg %p139
        %p392 = pneg %p136
        %s393 = sand.u32 %s27, 1
        %s394 = scalar_lea.sflag [#allocation4], %s393
        %s395 = sand.u32 %s152, 1
        %s396 = smul.addr %s395, 8
        %s397 = scalar_lea.vmem [#allocation11], %s396
        %p398 = pneg %p165
        %p399 = pneg %p162
        %p400 = scmp.lt.s32.totalorder %s33, 1
        %s401 = scalar_select %p400, %s33, 1
        %s402 = smul.addr %s401, 8
        %s403 = scalar_lea.vmem %s5, %s402
        %p404 = pneg %p191
        %p405 = pneg %p188
        %p406 = pneg %p219
        %p407 = pneg %p216
        %s408 = sand.u32 %s206, 1
        %s409 = scalar_lea.sflag [#allocation5], %s408
        %s410 = sand.u32 %s206, 1
        %s411 = smul.addr %s410, 16
        %s412 = scalar_lea.vmem [#allocation12], %s411
        %s413 = smul.u32 16, %s34
        %p414 = scmp.lt.s32.totalorder %s33, 1
        %s415 = scalar_select %p414, %s33, 1
        %s416 = smul.addr %s415, 8
        %s417 = scalar_lea.vmem %s5, %s416
        %p419 = scmp.eq.s32.totalorder %s34, 0
        // Predicated region
        $region65: #{tpu_custom_call.1} parent=43 // pred_check
          %p420 = pneg %p419
        $region66: #{tpu_custom_call.1} parent=43 // pred_check_branch
          %422 = sbr.rel (%p420) target = $region68
        $region67: #{tpu_custom_call.1} parent=43 // pred_region
          %vm423 = vcmask 408576
          %424 = vst.msk [vmem:[#allocation2] sm:$0xff] %vm423, 0.0
        $region68: #{tpu_custom_call.1} parent=43 // pred_fallthru
          _
        %v425 = vld [vmem:[%s344] sm:$0xff]
        %v426 = vld [vmem:[%s344 + $0x8] sm:$0xff]
        %v427 = vld [vmem:[%s344 + $0x10] sm:$0xff]
        %v428 = vld [vmem:[%s344 + $0x18] sm:$0xff]
        %v429 = vld [vmem:[%s344 + $0x20] sm:$0xff]
        %v430 = vld [vmem:[%s344 + $0x28] sm:$0xff]
        %v431 = vld [vmem:[%s344 + $0x30] sm:$0xff]
        %v432 = vld [vmem:[%s344 + $0x38] sm:$0xff]
        %v433 = vld [vmem:[%s344 + $0x40] sm:$0xff]
        %v434 = vld [vmem:[%s344 + $0x48] sm:$0xff]
        %v435 = vld [vmem:[%s344 + $0x50] sm:$0xff]
        %v436 = vld [vmem:[%s344 + $0x58] sm:$0xff]
        %v437 = vld [vmem:[%s344 + $0x60] sm:$0xff]
        %v438 = vld [vmem:[%s344 + $0x68] sm:$0xff]
        %v439 = vld [vmem:[%s344 + $0x70] sm:$0xff]
        %v440 = vld [vmem:[%s344 + $0x78] sm:$0xff]
        %v441 = vld [vmem:[%s344 + $0x80] sm:$0xff]
        %v442 = vld [vmem:[%s344 + $0x88] sm:$0xff]
        %v443 = vld [vmem:[%s344 + $0x90] sm:$0xff]
        %v444 = vld [vmem:[%s344 + $0x98] sm:$0xff]
        %v445 = vld [vmem:[%s344 + $0xa0] sm:$0xff]
        %v446 = vld [vmem:[%s344 + $0xa8] sm:$0xff]
        %v447 = vld [vmem:[%s344 + $0xb0] sm:$0xff]
        %v448 = vld [vmem:[%s344 + $0xb8] sm:$0xff]
        %v449 = vld [vmem:[%s344 + $0xc0] sm:$0xff]
        %v450 = vld [vmem:[%s344 + $0xc8] sm:$0xff]
        %v451 = vld [vmem:[%s344 + $0xd0] sm:$0xff]
        %v452 = vld [vmem:[%s344 + $0xd8] sm:$0xff]
        %v453 = vld [vmem:[%s344 + $0xe0] sm:$0xff]
        %v454 = vld [vmem:[%s344 + $0xe8] sm:$0xff]
        %v455 = vld [vmem:[%s344 + $0xf0] sm:$0xff]
        %v456 = vld [vmem:[%s344 + $0xf8] sm:$0xff]
        %v457 = vpack.c.bf16 %v427, %v425
        %v458 = vpack.c.bf16 %v428, %v426
        %v459 = vpack.c.bf16 %v431, %v429
        %v460 = vpack.c.bf16 %v432, %v430
        %v461 = vpack.c.bf16 %v435, %v433
        %v462 = vpack.c.bf16 %v436, %v434
        %v463 = vpack.c.bf16 %v439, %v437
        %v464 = vpack.c.bf16 %v440, %v438
        %v465 = vpack.c.bf16 %v443, %v441
        %v466 = vpack.c.bf16 %v444, %v442
        %v467 = vpack.c.bf16 %v447, %v445
        %v468 = vpack.c.bf16 %v448, %v446
        %v469 = vpack.c.bf16 %v451, %v449
        %v470 = vpack.c.bf16 %v452, %v450
        %v471 = vpack.c.bf16 %v455, %v453
        %v472 = vpack.c.bf16 %v456, %v454
        %v473 = vld [vmem:[#allocation8] sm:$0xff]
        %v474 = vld [vmem:[#allocation8 + $0x8] sm:$0xff]
        %v475 = vld [vmem:[#allocation8 + $0x10] sm:$0xff]
        %v476 = vld [vmem:[#allocation8 + $0x18] sm:$0xff]
        %v477 = vld [vmem:[#allocation8 + $0x20] sm:$0xff]
        %v478 = vld [vmem:[#allocation8 + $0x28] sm:$0xff]
        %v479 = vld [vmem:[#allocation8 + $0x30] sm:$0x11]
        %v487 = vunpack.c.l.b16 %v473
        %v488 = vunpack.c.h.b16 %v473
        %v489 = vunpack.c.l.b16 %v474
        %v490 = vunpack.c.h.b16 %v474
        %v491 = vunpack.c.l.b16 %v475
        %v492 = vunpack.c.h.b16 %v475
        %v493 = vunpack.c.l.b16 %v476
        %v494 = vunpack.c.h.b16 %v476
        %v495 = vunpack.c.l.b16 %v477
        %v496 = vunpack.c.h.b16 %v477
        %v497 = vunpack.c.l.b16 %v478
        %v498 = vunpack.c.h.b16 %v478
        %v499 = vunpack.c.l.b16 %v479
        %v500 = vunpack.c.h.b16 %v479
        %v501 = vpack.c.b16 %v489, %v487
        %v502 = vpack.c.b16 %v490, %v488
        %v503 = vpack.c.b16 %v493, %v491
        %v504 = vpack.c.b16 %v494, %v492
        %v505 = vpack.c.b16 %v497, %v495
        %v506 = vpack.c.b16 %v498, %v496
        %v507 = vpack.c.b16 %v499, %v499
        %v508 = vpack.c.b16 %v500, %v500
        %517 = vmatprep.subr.bf16.mxu0 %v502
        %518 = vmatpush1.bf16.xpose.msra.mxu0 %v501
        %519 = vmatprep.subr.bf16.mxu0 %v504
        %520 = vmatpush1.bf16.xpose.msra.mxu0 %v503
        %521 = vmatprep.subr.bf16.mxu0 %v506
        %522 = vmatpush1.bf16.xpose.msra.mxu0 %v505
        %523 = vmatprep.subr.bf16.mxu0 %v508
        %524 = vmatpush1.bf16.xpose.msra.mxu0 %v507
        %525 = vmatprep.subr.bf16.mxu0 0
        %526 = vmatpush1.bf16.xpose.msra.mxu0 0
        %527 = vmatprep.subr.bf16.mxu0 0
        %528 = vmatpush1.bf16.xpose.msra.mxu0 0
        %529 = vmatprep.subr.bf16.mxu0 0
        %530 = vmatpush1.bf16.xpose.msra.mxu0 0
        %531 = vmatprep.subr.bf16.mxu0 0
        %532 = vmatpush1.bf16.xpose.msra.mxu0 0
        %533 = vmatprep.subr.bf16.mxu0 0
        %534 = vmatpush1.bf16.xpose.msra.mxu0 0
        %535 = vmatprep.subr.bf16.mxu0 0
        %536 = vmatpush1.bf16.xpose.msra.mxu0 0
        %537 = vmatprep.subr.bf16.mxu0 0
        %538 = vmatpush1.bf16.xpose.msra.mxu0 0
        %539 = vmatprep.subr.bf16.mxu0 0
        %540 = vmatpush1.bf16.xpose.msra.mxu0 0
        %541 = vmatprep.subr.bf16.mxu0 0
        %542 = vmatpush1.bf16.xpose.msra.mxu0 0
        %543 = vmatprep.subr.bf16.mxu0 0
        %544 = vmatpush1.bf16.xpose.msra.mxu0 0
        %545 = vmatprep.subr.bf16.mxu0 0
        %546 = vmatpush1.bf16.xpose.msra.mxu0 0
        %547 = vmatprep.subr.bf16.mxu0 0
        %548 = vmatpush1.bf16.xpose.msra.mxu0 0
        %549 = vmatprep.mubr.bf16.mxu0 %v458
        %550 = vmatmul.mubr.bf16.gmra.mrb[0].mxu0 %v457
        %v551 = vpop.f32.mrb[0].mxu0
        %v552 = vadd.f32 0.0, %v551
        %v553 = vpop.f32.mrb[0].mxu0
        %v554 = vpop.f32.mrb[0].mxu0
        %v555 = vadd.f32 0.0, %v554
        %v556 = vpop.f32.mrb[0].mxu0
        %557 = vmatprep.mubr.bf16.mxu0 %v460
        %558 = vmatmul.mubr.bf16.gmra.mrb[0].mxu0 %v459
        %v559 = vpop.f32.mrb[0].mxu0
        %v560 = vadd.f32 0.0, %v559
        %v561 = vpop.f32.mrb[0].mxu0
        %v562 = vpop.f32.mrb[0].mxu0
        %v563 = vadd.f32 0.0, %v562
        %v564 = vpop.f32.mrb[0].mxu0
        %565 = vmatprep.mubr.bf16.mxu0 %v462
        %566 = vmatmul.mubr.bf16.gmra.mrb[0].mxu0 %v461
        %v567 = vpop.f32.mrb[0].mxu0
        %v568 = vadd.f32 0.0, %v567
        %v569 = vpop.f32.mrb[0].mxu0
        %v570 = vpop.f32.mrb[0].mxu0
        %v571 = vadd.f32 0.0, %v570
        %v572 = vpop.f32.mrb[0].mxu0
        %573 = vmatprep.mubr.bf16.mxu0 %v464
        %574 = vmatmul.mubr.bf16.gmra.mrb[0].mxu0 %v463
        %v575 = vpop.f32.mrb[0].mxu0
        %v576 = vadd.f32 0.0, %v575
        %v577 = vpop.f32.mrb[0].mxu0
        %v578 = vpop.f32.mrb[0].mxu0
        %v579 = vadd.f32 0.0, %v578
        %v580 = vpop.f32.mrb[0].mxu0
        %581 = vmatprep.mubr.bf16.mxu0 %v466
        %582 = vmatmul.mubr.bf16.gmra.mrb[0].mxu0 %v465
        %v583 = vpop.f32.mrb[0].mxu0
        %v584 = vadd.f32 0.0, %v583
        %v585 = vpop.f32.mrb[0].mxu0
        %v586 = vpop.f32.mrb[0].mxu0
        %v587 = vadd.f32 0.0, %v586
        %v588 = vpop.f32.mrb[0].mxu0
        %589 = vmatprep.mubr.bf16.mxu0 %v468
        %590 = vmatmul.mubr.bf16.gmra.mrb[0].mxu0 %v467
        %v591 = vpop.f32.mrb[0].mxu0
        %v592 = vadd.f32 0.0, %v591
        %v593 = vpop.f32.mrb[0].mxu0
        %v594 = vpop.f32.mrb[0].mxu0
        %v595 = vadd.f32 0.0, %v594
        %v596 = vpop.f32.mrb[0].mxu0
        %597 = vmatprep.mubr.bf16.mxu0 %v470
        %598 = vmatmul.mubr.bf16.gmra.mrb[0].mxu0 %v469
        %v599 = vpop.f32.mrb[0].mxu0
        %v600 = vadd.f32 0.0, %v599
        %v601 = vpop.f32.mrb[0].mxu0
        %v602 = vpop.f32.mrb[0].mxu0
        %v603 = vadd.f32 0.0, %v602
        %v604 = vpop.f32.mrb[0].mxu0
        %605 = vmatprep.mubr.bf16.mxu0 %v472
        %606 = vmatmul.mubr.bf16.gmra.mrb[0].mxu0 %v471
        %v607 = vpop.f32.mrb[0].mxu0
        %v608 = vadd.f32 0.0, %v607
        %v609 = vpop.f32.mrb[0].mxu0
        %v610 = vpop.f32.mrb[0].mxu0
        %v611 = vadd.f32 0.0, %v610
        %v612 = vpop.f32.mrb[0].mxu0
        %613 = vdwg.mxu0
        %v614 = vld [vmem:[#allocation2] sm:$0xff]
        %v615 = vld [vmem:[%s353] sm:$0xf]
        %v616 = vpack.c.bf16 %v555, %v552
        %v617 = vpack.c.bf16 %v563, %v560
        %v618 = vpack.c.bf16 %v571, %v568
        %v619 = vpack.c.bf16 %v579, %v576
        %v620 = vpack.c.bf16 %v587, %v584
        %v621 = vpack.c.bf16 %v595, %v592
        %v622 = vpack.c.bf16 %v603, %v600
        %v623 = vpack.c.bf16 %v611, %v608
        %624 = vmatprep.subr.bf16.mxu0 0
        %625 = vmatpush1.bf16.msra.mxu0 %v616
        %626 = vmatprep.subr.bf16.mxu0 0
        %627 = vmatpush1.bf16.msra.mxu0 %v617
        %628 = vmatprep.subr.bf16.mxu0 0
        %629 = vmatpush1.bf16.msra.mxu0 %v618
        %630 = vmatprep.subr.bf16.mxu0 0
        %631 = vmatpush1.bf16.msra.mxu0 %v619
        %632 = vmatprep.subr.bf16.mxu0 0
        %633 = vmatpush1.bf16.msra.mxu0 %v620
        %634 = vmatprep.subr.bf16.mxu0 0
        %635 = vmatpush1.bf16.msra.mxu0 %v621
        %636 = vmatprep.subr.bf16.mxu0 0
        %637 = vmatpush1.bf16.msra.mxu0 %v622
        %638 = vmatprep.subr.bf16.mxu0 0
        %639 = vmatpush1.bf16.msra.mxu0 %v623
        %640 = vmatprep.subr.bf16.mxu0 0
        %641 = vmatpush1.bf16.msra.mxu0 0
        %642 = vmatprep.subr.bf16.mxu0 0
        %643 = vmatpush1.bf16.msra.mxu0 0
        %644 = vmatprep.subr.bf16.mxu0 0
        %645 = vmatpush1.bf16.msra.mxu0 0
        %646 = vmatprep.subr.bf16.mxu0 0
        %647 = vmatpush1.bf16.msra.mxu0 0
        %648 = vmatprep.subr.bf16.mxu0 0
        %649 = vmatpush1.bf16.msra.mxu0 0
        %650 = vmatprep.subr.bf16.mxu0 0
        %651 = vmatpush1.bf16.msra.mxu0 0
        %652 = vmatprep.subr.bf16.mxu0 0
        %653 = vmatpush1.bf16.msra.mxu0 0
        %654 = vmatprep.subr.bf16.mxu0 0
        %655 = vmatpush1.bf16.msra.mxu0 0
        %656 = vmatprep.mubr.bf16.mxu0 0
        %657 = vmatmul.mubr.bf16.gmra.mrb[0].mxu0 %v615
        %v658 = vpop.f32.mrb[0].mxu0
        %v659 = vadd.f32 0.0, %v658
        %v660 = vpop.f32.mrb[0].mxu0
        %v661 = vpop.f32.mrb[0].mxu0
        %v662 = vpop.f32.mrb[0].mxu0
        %663 = vdwg.mxu0
        %v664 = vadd.f32 %v614, %v659
        %vm665 = vcmask 408576
        %666 = vst.msk [vmem:[#allocation2] sm:$0xff] %vm665, %v664
        %p667 = scmp.eq.s32.totalorder %s34, 1
        // Predicated region
        $region69: #{tpu_custom_call.1} parent=43 // pred_check
          %p668 = pneg %p667
        $region70: #{tpu_custom_call.1} parent=43 // pred_check_branch
          %670 = sbr.rel (%p668) target = $region72
        $region71: #{tpu_custom_call.1} parent=43 // pred_region
          %v671 = vld [vmem:[#allocation2] sm:$0xff]
          %v672 = vld [vmem:[%s370] sm:$0xff]
          %v673 = vmul.f32 %v671, %v672
          %v674 = vld [vmem:[%s417] sm:$0xff]
          %v675 = vadd.f32 %v673, %v674
          %v676 = vmax.f32 %v675, 0.0
          %v677 = vpack.c.bf16 %v676, %v676
          %v678 = vld [vmem:[#allocation9] sm:$0xff]
          %v679 = vld [vmem:[#allocation9 + $0x8] sm:$0xff]
          %v680 = vld [vmem:[#allocation9 + $0x10] sm:$0xff]
          %v681 = vld [vmem:[#allocation9 + $0x18] sm:$0xff]
          %v682 = vld [vmem:[#allocation9 + $0x20] sm:$0xff]
          %v683 = vld [vmem:[#allocation9 + $0x28] sm:$0xff]
          %v684 = vld [vmem:[#allocation9 + $0x30] sm:$0x11]
          %v692 = vunpack.c.l.b16 %v678
          %v693 = vunpack.c.h.b16 %v678
          %v694 = vunpack.c.l.b16 %v679
          %v695 = vunpack.c.h.b16 %v679
          %v696 = vunpack.c.l.b16 %v680
          %v697 = vunpack.c.h.b16 %v680
          %v698 = vunpack.c.l.b16 %v681
          %v699 = vunpack.c.h.b16 %v681
          %v700 = vunpack.c.l.b16 %v682
          %v701 = vunpack.c.h.b16 %v682
          %v702 = vunpack.c.l.b16 %v683
          %v703 = vunpack.c.h.b16 %v683
          %v704 = vunpack.c.l.b16 %v684
          %v705 = vunpack.c.h.b16 %v684
          %v706 = vpack.c.b16 %v694, %v692
          %v707 = vpack.c.b16 %v695, %v693
          %v708 = vpack.c.b16 %v698, %v696
          %v709 = vpack.c.b16 %v699, %v697
          %v710 = vpack.c.b16 %v702, %v700
          %v711 = vpack.c.b16 %v703, %v701
          %v712 = vpack.c.b16 %v704, %v704
          %v713 = vpack.c.b16 %v705, %v705
          %v721 = vsel %vm665, %v677, 0
          %vm723 = vcmask 1040384
          %v725 = vsel %vm723, %v712, 0
          %v728 = vsel %vm723, %v713, 0
          %730 = vmatprep.subr.bf16.mxu0 %v707
          %731 = vmatpush1.bf16.msra.mxu0 %v706
          %732 = vmatprep.subr.bf16.mxu0 %v709
          %733 = vmatpush1.bf16.msra.mxu0 %v708
          %734 = vmatprep.subr.bf16.mxu0 %v711
          %735 = vmatpush1.bf16.msra.mxu0 %v710
          %736 = vmatprep.subr.bf16.mxu0 %v728
          %737 = vmatpush1.bf16.msra.mxu0 %v725
          %738 = vmatprep.subr.bf16.mxu0 0
          %739 = vmatpush1.bf16.msra.mxu0 0
          %740 = vmatprep.subr.bf16.mxu0 0
          %741 = vmatpush1.bf16.msra.mxu0 0
          %742 = vmatprep.subr.bf16.mxu0 0
          %743 = vmatpush1.bf16.msra.mxu0 0
          %744 = vmatprep.subr.bf16.mxu0 0
          %745 = vmatpush1.bf16.msra.mxu0 0
          %746 = vmatprep.subr.bf16.mxu0 0
          %747 = vmatpush1.bf16.msra.mxu0 0
          %748 = vmatprep.subr.bf16.mxu0 0
          %749 = vmatpush1.bf16.msra.mxu0 0
          %750 = vmatprep.subr.bf16.mxu0 0
          %751 = vmatpush1.bf16.msra.mxu0 0
          %752 = vmatprep.subr.bf16.mxu0 0
          %753 = vmatpush1.bf16.msra.mxu0 0
          %754 = vmatprep.subr.bf16.mxu0 0
          %755 = vmatpush1.bf16.msra.mxu0 0
          %756 = vmatprep.subr.bf16.mxu0 0
          %757 = vmatpush1.bf16.msra.mxu0 0
          %758 = vmatprep.subr.bf16.mxu0 0
          %759 = vmatpush1.bf16.msra.mxu0 0
          %760 = vmatprep.subr.bf16.mxu0 0
          %761 = vmatpush1.bf16.msra.mxu0 0
          %762 = vmatprep.mubr.bf16.mxu0 0
          %763 = vmatmul.mubr.bf16.gmra.mrb[0].mxu0 %v721
          %v764 = vpop.f32.mrb[0].mxu0
          %v765 = vadd.f32 0.0, %v764
          %v766 = vpop.f32.mrb[0].mxu0
          %v767 = vadd.f32 0.0, %v766
          %v768 = vpop.f32.mrb[0].mxu0
          %v769 = vpop.f32.mrb[0].mxu0
          %770 = vdwg.mxu0
          %771 = vst [vmem:[%s412] sm:$0xff] %v765
          %772 = vst [vmem:[%s412 + $0x8] sm:$0xff] %v767
        $region72: #{tpu_custom_call.1} parent=43 // pred_fallthru
          _
        %s773 = sand.u32 %s206, 1
        %s774 = scalar_lea.sflag [#allocation5], %s773
        %s775 = sand.u32 %s206, 1
        %s776 = smul.addr %s775, 16
        %s777 = scalar_lea.vmem [#allocation12], %s776
        // Predicated region
        $region73: #{tpu_custom_call.1} parent=43 // pred_check
          %p778 = pneg %p216
        $region74: #{tpu_custom_call.1} parent=43 // pred_check_branch
          %780 = sbr.rel (%p778) target = $region76
        $region75: #{tpu_custom_call.1} parent=43 // pred_region
          %s782 = ssub.s32 256, 256
          %783 = vsyncadd %s774, %s782
          %s784 = smul.addr %s33, 2
          %s785 = smul.addr %s32, 4
          %s786 = sadd.s32 %s784, %s785
          %s787 = smul.addr %s786, 128
          %s788 = scalar_lea.hbm %s6, %s787
          %s790 = sshll.u32 %s777, 4
          %s791 = int_to_ptr.vmem [resolvable:$true] %s790
          %793 = dma.vmem_to_hbm [thread:$0]  %s791, 256, %s788, %s774
        $region76: #{tpu_custom_call.1} parent=43 // pred_fallthru
          _
      $region44: #{tpu_custom_call.1} parent=5 // pred_fallthru
        _
      %p794 = scmp.le.s32.totalorder 2, %s22
      // Predicated region
      $region77: #{tpu_custom_call.1} parent=5 // pred_check
        %p795 = pneg %p794
      $region78: #{tpu_custom_call.1} parent=5 // pred_check_branch
        %797 = sbr.rel (%p795) target = $region80
      $region79: #{tpu_custom_call.1} parent=5 // pred_region
        %s798 = ssub.s32 %s22, 2
        // Predicated region
        $region81: #{tpu_custom_call.1} parent=79 // pred_check
          %p799 = pneg %p222
        $region82: #{tpu_custom_call.1} parent=79 // pred_check_branch
          %801 = sbr.rel (%p799) target = $region84
        $region83: #{tpu_custom_call.1} parent=79 // pred_region
          %s802 = sand.u32 %s207, 1
          %s803 = scalar_lea.sflag [#allocation5], %s802
          %s804 = sand.u32 %s207, 1
          %s805 = smul.addr %s804, 16
          %s806 = scalar_lea.vmem [#allocation12], %s805
          %807 = dma.done %s803, 256
        $region84: #{tpu_custom_call.1} parent=79 // pred_fallthru
          _
      $region80: #{tpu_custom_call.1} parent=5 // pred_fallthru
        _
    $region6: #{tpu_custom_call.1} parent=1 // loop_footer
      %s26 = sadd.s32 1, %s22
    $region7: #{tpu_custom_call.1} parent=1 // loop_footer_branch
      %21 = sbr.rel target = $region3
    $region8: #{tpu_custom_call.1} parent=1 // loop_exit
      _
    %808 = vsyncpa [#allocation4], 1
    %s809 = scalar_lea.sflag [#allocation4], 1
    %810 = vsyncpa %s809, 1
    %811 = vsyncpa [#allocation7], 1
    %s812 = scalar_lea.sflag [#allocation7], 1
    %813 = vsyncpa %s812, 1
    %814 = vsyncpa [#allocation10], 1
    %815 = vsyncpa [#allocation5], 1
    %s816 = scalar_lea.sflag [#allocation5], 1
    %817 = vsyncpa %s816, 1

// kernel: tpu_custom_call.1
$region0: #{tpu_custom_call.1}
  #allocation0 [shape = 'u32[]', space=smem, size = 0x4, offset = 0x4, fixed_abs, tag = 'smem constant byte address 0x4 - core index']
  #allocation1 [shape = 'u32[144,128]{1,0:T(1,128)}', space=vmem, size = 0x12000, scoped, tag = 'internal scratch']
  #allocation2 [shape = 'f32[8,50]{1,0:T(8,128)}', space=vmem, size = 0x1000, scoped, tag = 'scratch operand']
  %s0 = inlined_call_operand.hbm [shape: f32[2,256,256], index: 0, kind: input, shape index: {}]
  %s1 = inlined_call_operand.hbm [shape: bf16[16,256], index: 1, kind: input, shape index: {}]
  %s2 = inlined_call_operand.hbm [shape: bf16[50,256], index: 2, kind: input, shape index: {}]
  %s3 = inlined_call_operand.hbm [shape: bf16[50,256], index: 3, kind: input, shape index: {}]
  %s4 = inlined_call_operand.hbm [shape: f32[16,50], index: 4, kind: input, shape index: {}]
  %s5 = inlined_call_operand.vmem [shape: f32[16,50], index: 5, kind: input, shape index: {}]
  %s6 = inlined_call_operand.hbm [shape: f32[2,16,256], index: 6, kind: output, shape index: {}]
  %s7 = sld [smem:[#allocation0]]
  $region85: #{tpu_custom_call.1} parent=0
    _
  %s9 = ssub.s32 1, %s7
  %s10 = scalar_select 0, %s9, %s7
  $region1: #{tpu_custom_call.1} parent=0
    #allocation3 [shape = 'u8[262144]{0}', space=vmem, size = 0x40000, scoped, tag = 'input window, operand 0']
    #allocation4 [shape = 's32[2]{0}', space=sflag, size = 0x8, scoped, tag = 'scoped memory for tpu_custom_call.1']
    #allocation5 [shape = 's32[2]{0}', space=sflag, size = 0x8, scoped, tag = 'scoped memory for tpu_custom_call.1']
    #allocation6 [shape = 'u8[4096]{0}', space=vmem, size = 0x1000, scoped, tag = 'input window, operand 1']
    #allocation7 [shape = 's32[2]{0}', space=sflag, size = 0x8, scoped, tag = 'scoped memory for tpu_custom_call.1']
    #allocation8 [shape = 'u8[28672]{0}', space=vmem, size = 0x7000, scoped, tag = 'input window, operand 2, single buffered']
    #allocation9 [shape = 'u8[28672]{0}', space=vmem, size = 0x7000, scoped, tag = 'input window, operand 3, single buffered']
    #allocation10 [shape = 's32[1]{0}', space=sflag, size = 0x4, scoped, tag = 'scoped memory for tpu_custom_call.1']
    #allocation11 [shape = 'u8[8192]{0}', space=vmem, size = 0x2000, scoped, tag = 'input window, operand 4']
    #allocation12 [shape = 'u8[16384]{0}', space=vmem, size = 0x4000, scoped, tag = 'output window, operand 0']
    %11 = vsyncpa [#allocation4], 0
    %s12 = scalar_lea.sflag [#allocation4], 1
    %13 = vsyncpa %s12, 0
    %14 = vsyncpa [#allocation7], 0
    %s15 = scalar_lea.sflag [#allocation7], 1
    %16 = vsyncpa %s15, 0
    %17 = vsyncpa [#allocation10], 0
    %18 = vsyncpa [#allocation5], 0
    %s19 = scalar_lea.sflag [#allocation5], 1
    %20 = vsyncpa %s19, 0
    loop: start=0, step=1, limit=10
    $region2: #{tpu_custom_call.1} parent=1 // loop_pre_header
      _
    $region3: #{tpu_custom_call.1} parent=1 // loop_header
      %s22 = sphi 0, %s26
      %p23 = scmp.ge.s32.totalorder %s22, 10
      %s29 = sphi 0, %s48
      %s30 = sphi 0, %s44
      %s31 = sphi 0, %s40
      %s32 = sphi 0, %s29
      %s33 = sphi 0, %s30
      %s34 = sphi 0, %s31
      %s35 = sphi 0, %s32
      %s36 = sphi 0, %s33
      %s37 = sphi 0, %s34
      %s53 = sphi 0, %s55
      %s56 = sphi 0, %s53
      %s57 = sphi 0, %s56
      %s73 = sphi 0, %s57
      %s81 = sphi 0, %s83
      %s84 = sphi 0, %s81
      %s85 = sphi 0, %s84
      %s101 = sphi 0, %s85
      %s105 = sphi 0, %s105
      %s107 = sphi 0, %s105
      %s108 = sphi 0, %s107
      %s122 = sphi 0, %s108
      %s126 = sphi 0, %s126
      %s128 = sphi 0, %s126
      %s129 = sphi 0, %s128
      %s143 = sphi 0, %s129
      %s149 = sphi 0, %s151
      %s152 = sphi 0, %s149
      %s153 = sphi 0, %s152
      %s169 = sphi 0, %s153
      %s175 = sphi 0, %s177
      %s178 = sphi 0, %s175
      %s179 = sphi 0, %s178
      %s195 = sphi 0, %s179
      %s203 = sphi 0, %s205
      %s206 = sphi 0, %s203
      %s207 = sphi 0, %s206
      %s223 = sphi 0, %s207
    $region4: #{tpu_custom_call.1} parent=1 // loop_header_branch
      %25 = sbr.rel (%p23) target = $region8
    $region5: #{tpu_custom_call.1} parent=1 // loop_body
      %s27 = ssub.s32 %s22, 1
      %s28 = ssub.s32 %s22, 2
      %s38 = sadd.s32 1, %s31
      %p39 = scmp.ge.s32.totalorder %s38, 2
      %s40 = scalar_select %p39, 0, %s38
      %s41 = sadd.s32 1, %s30
      %s42 = scalar_select %p39, %s41, %s30
      %p43 = scmp.ge.s32.totalorder %s42, 2
      %s44 = scalar_select %p43, 0, %s42
      %s45 = sadd.s32 1, %s29
      %s46 = scalar_select %p43, %s45, %s29
      %p47 = scmp.ge.s32.totalorder %s46, 2
      %s48 = scalar_select %p47, 0, %s46
      %s49 = ssub.s32 %s29, %s48
      %s50 = ssub.s32 %s31, %s40
      %s51 = sor.u32 %s49, %s50
      %p52 = scmp.eq.s32.totalorder %s51, 0
      %s54 = sadd.s32 %s53, 1
      %s55 = scalar_select %p52, %s53, %s54
      %p58 = pneg %p52
      %p59 = scmp.eq.s32.totalorder %s22, 7
      %p60 = por %p58, %p59
      %p61 = scmp.ne.s32.totalorder %s53, %s56
      %p62 = scmp.eq.s32.totalorder %s22, 0
      %p63 = por %p61, %p62
      %p64 = scmp.ne.s32.totalorder %s53, %s56
      %p65 = scmp.eq.s32.totalorder %s27, 7
      %p66 = por %p64, %p65
      %p67 = scmp.ne.s32.totalorder %s56, %s57
      %p68 = scmp.eq.s32.totalorder %s27, 0
      %p69 = por %p67, %p68
      %p70 = scmp.ne.s32.totalorder %s56, %s57
      %p71 = scmp.eq.s32.totalorder %s28, 7
      %p72 = por %p70, %p71
      %p74 = scmp.ne.s32.totalorder %s57, %s73
      %p75 = scmp.eq.s32.totalorder %s28, 0
      %p76 = por %p74, %p75
      %s77 = ssub.s32 %s30, %s44
      %s78 = ssub.s32 %s31, %s40
      %s79 = sor.u32 %s77, %s78
      %p80 = scmp.eq.s32.totalorder %s79, 0
      %s82 = sadd.s32 %s81, 1
      %s83 = scalar_select %p80, %s81, %s82
      %p86 = pneg %p80
      %p87 = scmp.eq.s32.totalorder %s22, 7
      %p88 = por %p86, %p87
      %p89 = scmp.ne.s32.totalorder %s81, %s84
      %p90 = scmp.eq.s32.totalorder %s22, 0
      %p91 = por %p89, %p90
      %p92 = scmp.ne.s32.totalorder %s81, %s84
      %p93 = scmp.eq.s32.totalorder %s27, 7
      %p94 = por %p92, %p93
      %p95 = scmp.ne.s32.totalorder %s84, %s85
      %p96 = scmp.eq.s32.totalorder %s27, 0
      %p97 = por %p95, %p96
      %p98 = scmp.ne.s32.totalorder %s84, %s85
      %p99 = scmp.eq.s32.totalorder %s28, 7
      %p100 = por %p98, %p99
      %p102 = scmp.ne.s32.totalorder %s85, %s101
      %p103 = scmp.eq.s32.totalorder %s28, 0
      %p104 = por %p102, %p103
      %s106 = sadd.s32 %s105, 1
      %p109 = scmp.eq.s32.totalorder %s22, 7
      %p110 = scmp.ne.s32.totalorder %s105, %s107
      %p111 = scmp.eq.s32.totalorder %s22, 0
      %p112 = por %p110, %p111
      %p113 = scmp.ne.s32.totalorder %s105, %s107
      %p114 = scmp.eq.s32.totalorder %s27, 7
      %p115 = por %p113, %p114
      %p116 = scmp.ne.s32.totalorder %s107, %s108
      %p117 = scmp.eq.s32.totalorder %s27, 0
      %p118 = por %p116, %p117
      %p119 = scmp.ne.s32.totalorder %s107, %s108
      %p120 = scmp.eq.s32.totalorder %s28, 7
      %p121 = por %p119, %p120
      %p123 = scmp.ne.s32.totalorder %s108, %s122
      %p124 = scmp.eq.s32.totalorder %s28, 0
      %p125 = por %p123, %p124
      %s127 = sadd.s32 %s126, 1
      %p130 = scmp.eq.s32.totalorder %s22, 7
      %p131 = scmp.ne.s32.totalorder %s126, %s128
      %p132 = scmp.eq.s32.totalorder %s22, 0
      %p133 = por %p131, %p132
      %p134 = scmp.ne.s32.totalorder %s126, %s128
      %p135 = scmp.eq.s32.totalorder %s27, 7
      %p136 = por %p134, %p135
      %p137 = scmp.ne.s32.totalorder %s128, %s129
      %p138 = scmp.eq.s32.totalorder %s27, 0
      %p139 = por %p137, %p138
      %p140 = scmp.ne.s32.totalorder %s128, %s129
      %p141 = scmp.eq.s32.totalorder %s28, 7
      %p142 = por %p140, %p141
      %p144 = scmp.ne.s32.totalorder %s129, %s143
      %p145 = scmp.eq.s32.totalorder %s28, 0
      %p146 = por %p144, %p145
      %s147 = ssub.s32 %s30, %s44
      %p148 = scmp.eq.s32.totalorder %s147, 0
      %s150 = sadd.s32 %s149, 1
      %s151 = scalar_select %p148, %s149, %s150
      %p154 = pneg %p148
      %p155 = scmp.eq.s32.totalorder %s22, 7
      %p156 = por %p154, %p155
      %p157 = scmp.ne.s32.totalorder %s149, %s152
      %p158 = scmp.eq.s32.totalorder %s22, 0
      %p159 = por %p157, %p158
      %p160 = scmp.ne.s32.totalorder %s149, %s152
      %p161 = scmp.eq.s32.totalorder %s27, 7
      %p162 = por %p160, %p161
      %p163 = scmp.ne.s32.totalorder %s152, %s153
      %p164 = scmp.eq.s32.totalorder %s27, 0
      %p165 = por %p163, %p164
      %p166 = scmp.ne.s32.totalorder %s152, %s153
      %p167 = scmp.eq.s32.totalorder %s28, 7
      %p168 = por %p166, %p167
      %p170 = scmp.ne.s32.totalorder %s153, %s169
      %p171 = scmp.eq.s32.totalorder %s28, 0
      %p172 = por %p170, %p171
      %s173 = ssub.s32 %s30, %s44
      %p174 = scmp.eq.s32.totalorder %s173, 0
      %s176 = sadd.s32 %s175, 1
      %s177 = scalar_select %p174, %s175, %s176
      %p180 = pneg %p174
      %p181 = scmp.eq.s32.totalorder %s22, 7
      %p182 = por %p180, %p181
      %p183 = scmp.ne.s32.totalorder %s175, %s178
      %p184 = scmp.eq.s32.totalorder %s22, 0
      %p185 = por %p183, %p184
      %p186 = scmp.ne.s32.totalorder %s175, %s178
      %p187 = scmp.eq.s32.totalorder %s27, 7
      %p188 = por %p186, %p187
      %p189 = scmp.ne.s32.totalorder %s178, %s179
      %p190 = scmp.eq.s32.totalorder %s27, 0
      %p191 = por %p189, %p190
      %p192 = scmp.ne.s32.totalorder %s178, %s179
      %p193 = scmp.eq.s32.totalorder %s28, 7
      %p194 = por %p192, %p193
      %p196 = scmp.ne.s32.totalorder %s179, %s195
      %p197 = scmp.eq.s32.totalorder %s28, 0
      %p198 = por %p196, %p197
      %s199 = ssub.s32 %s29, %s48
      %s200 = ssub.s32 %s30, %s44
      %s201 = sor.u32 %s199, %s200
      %p202 = scmp.eq.s32.totalorder %s201, 0
      %s204 = sadd.s32 %s203, 1
      %s205 = scalar_select %p202, %s203, %s204
      %p208 = pneg %p202
      %p209 = scmp.eq.s32.totalorder %s22, 7
      %p210 = por %p208, %p209
      %p211 = scmp.ne.s32.totalorder %s203, %s206
      %p212 = scmp.eq.s32.totalorder %s22, 0
      %p213 = por %p211, %p212
      %p214 = scmp.ne.s32.totalorder %s203, %s206
      %p215 = scmp.eq.s32.totalorder %s27, 7
      %p216 = por %p214, %p215
      %p217 = scmp.ne.s32.totalorder %s206, %s207
      %p218 = scmp.eq.s32.totalorder %s27, 0
      %p219 = por %p217, %p218
      %p220 = scmp.ne.s32.totalorder %s206, %s207
      %p221 = scmp.eq.s32.totalorder %s28, 7
      %p222 = por %p220, %p221
      %p224 = scmp.ne.s32.totalorder %s207, %s223
      %p225 = scmp.eq.s32.totalorder %s28, 0
      %p226 = por %p224, %p225
      %p227 = scmp.le.s32.totalorder 1, %s22
      %p228 = scmp.lt.s32.totalorder %s22, 9
      %p229 = pnand %p227, %p228
      %p230 = pneg %p229
      // Predicated region
      $region9: #{tpu_custom_call.1} parent=5 // pred_check
        _
      $region10: #{tpu_custom_call.1} parent=5 // pred_check_branch
        %232 = sbr.rel (%p229) target = $region12
      $region11: #{tpu_custom_call.1} parent=5 // pred_region
        %s233 = ssub.s32 %s22, 1
        // Predicated region
        $region13: #{tpu_custom_call.1} parent=11 // pred_check
          %p234 = pneg %p118
        $region14: #{tpu_custom_call.1} parent=11 // pred_check_branch
          %236 = sbr.rel (%p234) target = $region16
        $region15: #{tpu_custom_call.1} parent=11 // pred_region
          %s238 = ssub.s32 896, 896
          %239 = vsyncadd [#allocation7], %s238
          %s240 = sshll.u32 [#allocation8], 4
          %s241 = int_to_ptr.vmem [resolvable:$true] %s240
          %246 = dma.hbm_to_vmem [thread:$0]  %s2, 896, %s241, [#allocation7], 128, 128, 8
        $region16: #{tpu_custom_call.1} parent=11 // pred_fallthru
          _
        // Predicated region
        $region17: #{tpu_custom_call.1} parent=11 // pred_check
          %p247 = pneg %p139
        $region18: #{tpu_custom_call.1} parent=11 // pred_check_branch
          %249 = sbr.rel (%p247) target = $region20
        $region19: #{tpu_custom_call.1} parent=11 // pred_region
          %s251 = ssub.s32 896, 896
          %252 = vsyncadd [#allocation10], %s251
          %s253 = sshll.u32 [#allocation9], 4
          %s254 = int_to_ptr.vmem [resolvable:$true] %s253
          %259 = dma.hbm_to_vmem [thread:$0]  %s3, 896, %s254, [#allocation10], 128, 128, 8
        $region20: #{tpu_custom_call.1} parent=11 // pred_fallthru
          _
      $region12: #{tpu_custom_call.1} parent=5 // pred_fallthru
        _
      %p260 = scmp.lt.s32.totalorder %s22, 8
      // Predicated region
      $region21: #{tpu_custom_call.1} parent=5 // pred_check
        %p261 = pneg %p260
      $region22: #{tpu_custom_call.1} parent=5 // pred_check_branch
        %263 = sbr.rel (%p261) target = $region24
      $region23: #{tpu_custom_call.1} parent=5 // pred_region
        // Predicated region
        $region25: #{tpu_custom_call.1} parent=23 // pred_check
          %p264 = pneg %p63
        $region26: #{tpu_custom_call.1} parent=23 // pred_check_branch
          %266 = sbr.rel (%p264) target = $region28
        $region27: #{tpu_custom_call.1} parent=23 // pred_region
          %s267 = sand.u32 %s22, 1
          %s268 = scalar_lea.sflag [#allocation4], %s267
          %s269 = sand.u32 %s53, 1
          %s270 = smul.addr %s269, 256
          %s271 = scalar_lea.vmem [#allocation3], %s270
          %s272 = smul.u32 16, %s31
          %s274 = ssub.s32 4096, 4096
          %275 = vsyncadd %s268, %s274
          %s276 = smul.addr %s272, 2
          %s277 = smul.addr %s29, 64
          %s278 = sadd.s32 %s276, %s277
          %s279 = smul.addr %s278, 128
          %s280 = scalar_lea.hbm %s0, %s279
          %s281 = sshll.u32 %s271, 4
          %s282 = int_to_ptr.vmem [resolvable:$true] %s281
          %287 = dma.hbm_to_vmem [thread:$0]  %s280, 4096, %s282, %s268, 256, 256, 16
        $region28: #{tpu_custom_call.1} parent=23 // pred_fallthru
          _
        // Predicated region
        $region29: #{tpu_custom_call.1} parent=23 // pred_check
          %p288 = pneg %p91
        $region30: #{tpu_custom_call.1} parent=23 // pred_check_branch
          %290 = sbr.rel (%p288) target = $region32
        $region31: #{tpu_custom_call.1} parent=23 // pred_region
          %s291 = sand.u32 %s22, 1
          %s292 = scalar_lea.sflag [#allocation7], %s291
          %s293 = sand.u32 %s81, 1
          %s294 = smul.addr %s293, 4
          %s295 = scalar_lea.vmem [#allocation6], %s294
          %s297 = ssub.s32 64, 64
          %298 = vsyncadd %s292, %s297
          %s299 = smul.addr %s30, 2
          %s300 = sadd.s32 %s31, %s299
          %s301 = smul.addr %s300, 64
          %s302 = scalar_lea.hbm %s1, %s301
          %s304 = sshll.u32 %s295, 4
          %s305 = int_to_ptr.vmem [resolvable:$true] %s304
          %307 = dma.hbm_to_vmem [thread:$0]  %s302, 64, %s305, %s292
        $region32: #{tpu_custom_call.1} parent=23 // pred_fallthru
          _
        // Predicated region
        $region33: #{tpu_custom_call.1} parent=23 // pred_check
          %p308 = pneg %p159
        $region34: #{tpu_custom_call.1} parent=23 // pred_check_branch
          %310 = sbr.rel (%p308) target = $region36
        $region35: #{tpu_custom_call.1} parent=23 // pred_region
          %s311 = sand.u32 %s22, 1
          %s312 = scalar_lea.sflag [#allocation4], %s311
          %s313 = sand.u32 %s149, 1
          %s314 = smul.addr %s313, 8
          %s315 = scalar_lea.vmem [#allocation11], %s314
          %s317 = ssub.s32 128, 128
          %318 = vsyncadd %s312, %s317
          %s319 = smul.addr %s30, 128
          %s320 = scalar_lea.hbm %s4, %s319
          %s322 = sshll.u32 %s315, 4
          %s323 = int_to_ptr.vmem [resolvable:$true] %s322
          %325 = dma.hbm_to_vmem [thread:$0]  %s320, 128, %s323, %s312
        $region36: #{tpu_custom_call.1} parent=23 // pred_fallthru
          _
        // Predicated region
        $region37: #{tpu_custom_call.1} parent=23 // pred_check
          %p326 = pneg %p185
        $region38: #{tpu_custom_call.1} parent=23 // pred_check_branch
          %328 = sbr.rel (%p326) target = $region40
        $region39: #{tpu_custom_call.1} parent=23 // pred_region
          %p329 = scmp.lt.s32.totalorder %s30, 1
          %s330 = scalar_select %p329, %s30, 1
          %s331 = smul.addr %s330, 8
          %s332 = scalar_lea.vmem %s5, %s331
        $region40: #{tpu_custom_call.1} parent=23 // pred_fallthru
          _
      $region24: #{tpu_custom_call.1} parent=5 // pred_fallthru
        _
      %p333 = scmp.le.s32.totalorder 1, %s22
      %p334 = scmp.lt.s32.totalorder %s22, 9
      %p335 = pnand %p333, %p334
      %p336 = pneg %p335
      // Predicated region
      $region41: #{tpu_custom_call.1} parent=5 // pred_check
        _
      $region42: #{tpu_custom_call.1} parent=5 // pred_check_branch
        %338 = sbr.rel (%p335) target = $region44
      $region43: #{tpu_custom_call.1} parent=5 // pred_region
        %s339 = ssub.s32 %s22, 1
        %s340 = sand.u32 %s27, 1
        %s341 = scalar_lea.sflag [#allocation4], %s340
        %s342 = sand.u32 %s56, 1
        %s343 = smul.addr %s342, 256
        %s344 = scalar_lea.vmem [#allocation3], %s343
        // Predicated region
        $region45: #{tpu_custom_call.1} parent=43 // pred_check
          %p345 = pneg %p69
        $region46: #{tpu_custom_call.1} parent=43 // pred_check_branch
          %347 = sbr.rel (%p345) target = $region48
        $region47: #{tpu_custom_call.1} parent=43 // pred_region
          %348 = dma.done %s341, 4096
        $region48: #{tpu_custom_call.1} parent=43 // pred_fallthru
          _
        %s349 = sand.u32 %s27, 1
        %s350 = scalar_lea.sflag [#allocation7], %s349
        %s351 = sand.u32 %s84, 1
        %s352 = smul.addr %s351, 4
        %s353 = scalar_lea.vmem [#allocation6], %s352
        // Predicated region
        $region49: #{tpu_custom_call.1} parent=43 // pred_check
          %p354 = pneg %p97
        $region50: #{tpu_custom_call.1} parent=43 // pred_check_branch
          %356 = sbr.rel (%p354) target = $region52
        $region51: #{tpu_custom_call.1} parent=43 // pred_region
          %357 = dma.done %s350, 64
        $region52: #{tpu_custom_call.1} parent=43 // pred_fallthru
          _
        // Predicated region
        $region53: #{tpu_custom_call.1} parent=43 // pred_check
          %p358 = pneg %p118
        $region54: #{tpu_custom_call.1} parent=43 // pred_check_branch
          %360 = sbr.rel (%p358) target = $region56
        $region55: #{tpu_custom_call.1} parent=43 // pred_region
          %361 = dma.done [#allocation7], 896
        $region56: #{tpu_custom_call.1} parent=43 // pred_fallthru
          _
        // Predicated region
        $region57: #{tpu_custom_call.1} parent=43 // pred_check
          %p362 = pneg %p139
        $region58: #{tpu_custom_call.1} parent=43 // pred_check_branch
          %364 = sbr.rel (%p362) target = $region60
        $region59: #{tpu_custom_call.1} parent=43 // pred_region
          %365 = dma.done [#allocation10], 896
        $region60: #{tpu_custom_call.1} parent=43 // pred_fallthru
          _
        %s366 = sand.u32 %s27, 1
        %s367 = scalar_lea.sflag [#allocation4], %s366
        %s368 = sand.u32 %s152, 1
        %s369 = smul.addr %s368, 8
        %s370 = scalar_lea.vmem [#allocation11], %s369
        // Predicated region
        $region61: #{tpu_custom_call.1} parent=43 // pred_check
          %p371 = pneg %p165
        $region62: #{tpu_custom_call.1} parent=43 // pred_check_branch
          %373 = sbr.rel (%p371) target = $region64
        $region63: #{tpu_custom_call.1} parent=43 // pred_region
          %374 = dma.done %s367, 128
        $region64: #{tpu_custom_call.1} parent=43 // pred_fallthru
          _
        %s375 = sand.u32 %s27, 1
        %s376 = scalar_lea.sflag [#allocation4], %s375
        %s377 = sand.u32 %s56, 1
        %s378 = smul.addr %s377, 256
        %s379 = scalar_lea.vmem [#allocation3], %s378
        %p380 = pneg %p69
        %p381 = pneg %p66
        %s382 = sand.u32 %s27, 1
        %s383 = scalar_lea.sflag [#allocation7], %s382
        %s384 = sand.u32 %s84, 1
        %s385 = smul.addr %s384, 4
        %s386 = scalar_lea.vmem [#allocation6], %s385
        %p387 = pneg %p97
        %p388 = pneg %p94
        %p389 = pneg %p118
        %p390 = pneg %p115
        %p391 = pneg %p139
        %p392 = pneg %p136
        %s393 = sand.u32 %s27, 1
        %s394 = scalar_lea.sflag [#allocation4], %s393
        %s395 = sand.u32 %s152, 1
        %s396 = smul.addr %s395, 8
        %s397 = scalar_lea.vmem [#allocation11], %s396
        %p398 = pneg %p165
        %p399 = pneg %p162
        %p400 = scmp.lt.s32.totalorder %s33, 1
        %s401 = scalar_select %p400, %s33, 1
        %s402 = smul.addr %s401, 8
        %s403 = scalar_lea.vmem %s5, %s402
        %p404 = pneg %p191
        %p405 = pneg %p188
        %p406 = pneg %p219
        %p407 = pneg %p216
        %s408 = sand.u32 %s206, 1
        %s409 = scalar_lea.sflag [#allocation5], %s408
        %s410 = sand.u32 %s206, 1
        %s411 = smul.addr %s410, 16
        %s412 = scalar_lea.vmem [#allocation12], %s411
        %s413 = smul.u32 16, %s34
        %p414 = scmp.lt.s32.totalorder %s33, 1
        %s415 = scalar_select %p414, %s33, 1
        %s416 = smul.addr %s415, 8
        %s417 = scalar_lea.vmem %s5, %s416
        %p419 = scmp.eq.s32.totalorder %s34, 0
        // Predicated region
        $region65: #{tpu_custom_call.1} parent=43 // pred_check
          %p420 = pneg %p419
        $region66: #{tpu_custom_call.1} parent=43 // pred_check_branch
          %422 = sbr.rel (%p420) target = $region68
        $region67: #{tpu_custom_call.1} parent=43 // pred_region
          %vm423 = vcmask 408576
          %424 = vst.msk [vmem:[#allocation2] sm:$0xff] %vm423, 0.0
        $region68: #{tpu_custom_call.1} parent=43 // pred_fallthru
          _
        %v425 = vld [vmem:[%s344] sm:$0xff]
        %v426 = vld [vmem:[%s344 + $0x8] sm:$0xff]
        %v427 = vld [vmem:[%s344 + $0x10] sm:$0xff]
        %v428 = vld [vmem:[%s344 + $0x18] sm:$0xff]
        %v429 = vld [vmem:[%s344 + $0x20] sm:$0xff]
        %v430 = vld [vmem:[%s344 + $0x28] sm:$0xff]
        %v431 = vld [vmem:[%s344 + $0x30] sm:$0xff]
        %v432 = vld [vmem:[%s344 + $0x38] sm:$0xff]
        %v433 = vld [vmem:[%s344 + $0x40] sm:$0xff]
        %v434 = vld [vmem:[%s344 + $0x48] sm:$0xff]
        %v435 = vld [vmem:[%s344 + $0x50] sm:$0xff]
        %v436 = vld [vmem:[%s344 + $0x58] sm:$0xff]
        %v437 = vld [vmem:[%s344 + $0x60] sm:$0xff]
        %v438 = vld [vmem:[%s344 + $0x68] sm:$0xff]
        %v439 = vld [vmem:[%s344 + $0x70] sm:$0xff]
        %v440 = vld [vmem:[%s344 + $0x78] sm:$0xff]
        %v441 = vld [vmem:[%s344 + $0x80] sm:$0xff]
        %v442 = vld [vmem:[%s344 + $0x88] sm:$0xff]
        %v443 = vld [vmem:[%s344 + $0x90] sm:$0xff]
        %v444 = vld [vmem:[%s344 + $0x98] sm:$0xff]
        %v445 = vld [vmem:[%s344 + $0xa0] sm:$0xff]
        %v446 = vld [vmem:[%s344 + $0xa8] sm:$0xff]
        %v447 = vld [vmem:[%s344 + $0xb0] sm:$0xff]
        %v448 = vld [vmem:[%s344 + $0xb8] sm:$0xff]
        %v449 = vld [vmem:[%s344 + $0xc0] sm:$0xff]
        %v450 = vld [vmem:[%s344 + $0xc8] sm:$0xff]
        %v451 = vld [vmem:[%s344 + $0xd0] sm:$0xff]
        %v452 = vld [vmem:[%s344 + $0xd8] sm:$0xff]
        %v453 = vld [vmem:[%s344 + $0xe0] sm:$0xff]
        %v454 = vld [vmem:[%s344 + $0xe8] sm:$0xff]
        %v455 = vld [vmem:[%s344 + $0xf0] sm:$0xff]
        %v456 = vld [vmem:[%s344 + $0xf8] sm:$0xff]
        %v457 = vpack.c.bf16 %v427, %v425
        %v458 = vpack.c.bf16 %v428, %v426
        %v459 = vpack.c.bf16 %v431, %v429
        %v460 = vpack.c.bf16 %v432, %v430
        %v461 = vpack.c.bf16 %v435, %v433
        %v462 = vpack.c.bf16 %v436, %v434
        %v463 = vpack.c.bf16 %v439, %v437
        %v464 = vpack.c.bf16 %v440, %v438
        %v465 = vpack.c.bf16 %v443, %v441
        %v466 = vpack.c.bf16 %v444, %v442
        %v467 = vpack.c.bf16 %v447, %v445
        %v468 = vpack.c.bf16 %v448, %v446
        %v469 = vpack.c.bf16 %v451, %v449
        %v470 = vpack.c.bf16 %v452, %v450
        %v471 = vpack.c.bf16 %v455, %v453
        %v472 = vpack.c.bf16 %v456, %v454
        %v473 = vld [vmem:[#allocation8] sm:$0xff]
        %v474 = vld [vmem:[#allocation8 + $0x8] sm:$0xff]
        %v475 = vld [vmem:[#allocation8 + $0x10] sm:$0xff]
        %v476 = vld [vmem:[#allocation8 + $0x18] sm:$0xff]
        %v477 = vld [vmem:[#allocation8 + $0x20] sm:$0xff]
        %v478 = vld [vmem:[#allocation8 + $0x28] sm:$0xff]
        %v479 = vld [vmem:[#allocation8 + $0x30] sm:$0x11]
        %v487 = vunpack.c.l.b16 %v473
        %v488 = vunpack.c.h.b16 %v473
        %v489 = vunpack.c.l.b16 %v474
        %v490 = vunpack.c.h.b16 %v474
        %v491 = vunpack.c.l.b16 %v475
        %v492 = vunpack.c.h.b16 %v475
        %v493 = vunpack.c.l.b16 %v476
        %v494 = vunpack.c.h.b16 %v476
        %v495 = vunpack.c.l.b16 %v477
        %v496 = vunpack.c.h.b16 %v477
        %v497 = vunpack.c.l.b16 %v478
        %v498 = vunpack.c.h.b16 %v478
        %v499 = vunpack.c.l.b16 %v479
        %v500 = vunpack.c.h.b16 %v479
        %v501 = vpack.c.b16 %v489, %v487
        %v502 = vpack.c.b16 %v490, %v488
        %v503 = vpack.c.b16 %v493, %v491
        %v504 = vpack.c.b16 %v494, %v492
        %v505 = vpack.c.b16 %v497, %v495
        %v506 = vpack.c.b16 %v498, %v496
        %v507 = vpack.c.b16 %v499, %v499
        %v508 = vpack.c.b16 %v500, %v500
        %517 = vmatprep.subr.bf16.mxu0 %v502
        %518 = vmatpush1.bf16.xpose.msra.mxu0 %v501
        %519 = vmatprep.subr.bf16.mxu0 %v504
        %520 = vmatpush1.bf16.xpose.msra.mxu0 %v503
        %521 = vmatprep.subr.bf16.mxu0 %v506
        %522 = vmatpush1.bf16.xpose.msra.mxu0 %v505
        %523 = vmatprep.subr.bf16.mxu0 %v508
        %524 = vmatpush1.bf16.xpose.msra.mxu0 %v507
        %525 = vmatprep.subr.bf16.mxu0 0
        %526 = vmatpush1.bf16.xpose.msra.mxu0 0
        %527 = vmatprep.subr.bf16.mxu0 0
        %528 = vmatpush1.bf16.xpose.msra.mxu0 0
        %529 = vmatprep.subr.bf16.mxu0 0
        %530 = vmatpush1.bf16.xpose.msra.mxu0 0
        %531 = vmatprep.subr.bf16.mxu0 0
        %532 = vmatpush1.bf16.xpose.msra.mxu0 0
        %533 = vmatprep.subr.bf16.mxu0 0
        %534 = vmatpush1.bf16.xpose.msra.mxu0 0
        %535 = vmatprep.subr.bf16.mxu0 0
        %536 = vmatpush1.bf16.xpose.msra.mxu0 0
        %537 = vmatprep.subr.bf16.mxu0 0
        %538 = vmatpush1.bf16.xpose.msra.mxu0 0
        %539 = vmatprep.subr.bf16.mxu0 0
        %540 = vmatpush1.bf16.xpose.msra.mxu0 0
        %541 = vmatprep.subr.bf16.mxu0 0
        %542 = vmatpush1.bf16.xpose.msra.mxu0 0
        %543 = vmatprep.subr.bf16.mxu0 0
        %544 = vmatpush1.bf16.xpose.msra.mxu0 0
        %545 = vmatprep.subr.bf16.mxu0 0
        %546 = vmatpush1.bf16.xpose.msra.mxu0 0
        %547 = vmatprep.subr.bf16.mxu0 0
        %548 = vmatpush1.bf16.xpose.msra.mxu0 0
        %549 = vmatprep.mubr.bf16.mxu0 %v458
        %550 = vmatmul.mubr.bf16.gmra.mrb[0].mxu0 %v457
        %v551 = vpop.f32.mrb[0].mxu0
        %v552 = vadd.f32 0.0, %v551
        %v553 = vpop.f32.mrb[0].mxu0
        %v554 = vpop.f32.mrb[0].mxu0
        %v555 = vadd.f32 0.0, %v554
        %v556 = vpop.f32.mrb[0].mxu0
        %557 = vmatprep.mubr.bf16.mxu0 %v460
        %558 = vmatmul.mubr.bf16.gmra.mrb[0].mxu0 %v459
        %v559 = vpop.f32.mrb[0].mxu0
        %v560 = vadd.f32 0.0, %v559
        %v561 = vpop.f32.mrb[0].mxu0
        %v562 = vpop.f32.mrb[0].mxu0
        %v563 = vadd.f32 0.0, %v562
        %v564 = vpop.f32.mrb[0].mxu0
        %565 = vmatprep.mubr.bf16.mxu0 %v462
        %566 = vmatmul.mubr.bf16.gmra.mrb[0].mxu0 %v461
        %v567 = vpop.f32.mrb[0].mxu0
        %v568 = vadd.f32 0.0, %v567
        %v569 = vpop.f32.mrb[0].mxu0
        %v570 = vpop.f32.mrb[0].mxu0
        %v571 = vadd.f32 0.0, %v570
        %v572 = vpop.f32.mrb[0].mxu0
        %573 = vmatprep.mubr.bf16.mxu0 %v464
        %574 = vmatmul.mubr.bf16.gmra.mrb[0].mxu0 %v463
        %v575 = vpop.f32.mrb[0].mxu0
        %v576 = vadd.f32 0.0, %v575
        %v577 = vpop.f32.mrb[0].mxu0
        %v578 = vpop.f32.mrb[0].mxu0
        %v579 = vadd.f32 0.0, %v578
        %v580 = vpop.f32.mrb[0].mxu0
        %581 = vmatprep.mubr.bf16.mxu0 %v466
        %582 = vmatmul.mubr.bf16.gmra.mrb[0].mxu0 %v465
        %v583 = vpop.f32.mrb[0].mxu0
        %v584 = vadd.f32 0.0, %v583
        %v585 = vpop.f32.mrb[0].mxu0
        %v586 = vpop.f32.mrb[0].mxu0
        %v587 = vadd.f32 0.0, %v586
        %v588 = vpop.f32.mrb[0].mxu0
        %589 = vmatprep.mubr.bf16.mxu0 %v468
        %590 = vmatmul.mubr.bf16.gmra.mrb[0].mxu0 %v467
        %v591 = vpop.f32.mrb[0].mxu0
        %v592 = vadd.f32 0.0, %v591
        %v593 = vpop.f32.mrb[0].mxu0
        %v594 = vpop.f32.mrb[0].mxu0
        %v595 = vadd.f32 0.0, %v594
        %v596 = vpop.f32.mrb[0].mxu0
        %597 = vmatprep.mubr.bf16.mxu0 %v470
        %598 = vmatmul.mubr.bf16.gmra.mrb[0].mxu0 %v469
        %v599 = vpop.f32.mrb[0].mxu0
        %v600 = vadd.f32 0.0, %v599
        %v601 = vpop.f32.mrb[0].mxu0
        %v602 = vpop.f32.mrb[0].mxu0
        %v603 = vadd.f32 0.0, %v602
        %v604 = vpop.f32.mrb[0].mxu0
        %605 = vmatprep.mubr.bf16.mxu0 %v472
        %606 = vmatmul.mubr.bf16.gmra.mrb[0].mxu0 %v471
        %v607 = vpop.f32.mrb[0].mxu0
        %v608 = vadd.f32 0.0, %v607
        %v609 = vpop.f32.mrb[0].mxu0
        %v610 = vpop.f32.mrb[0].mxu0
        %v611 = vadd.f32 0.0, %v610
        %v612 = vpop.f32.mrb[0].mxu0
        %613 = vdwg.mxu0
        %v614 = vld [vmem:[#allocation2] sm:$0xff]
        %v615 = vld [vmem:[%s353] sm:$0xf]
        %v616 = vpack.c.bf16 %v555, %v552
        %v617 = vpack.c.bf16 %v563, %v560
        %v618 = vpack.c.bf16 %v571, %v568
        %v619 = vpack.c.bf16 %v579, %v576
        %v620 = vpack.c.bf16 %v587, %v584
        %v621 = vpack.c.bf16 %v595, %v592
        %v622 = vpack.c.bf16 %v603, %v600
        %v623 = vpack.c.bf16 %v611, %v608
        %624 = vmatprep.subr.bf16.mxu0 0
        %625 = vmatpush1.bf16.msra.mxu0 %v616
        %626 = vmatprep.subr.bf16.mxu0 0
        %627 = vmatpush1.bf16.msra.mxu0 %v617
        %628 = vmatprep.subr.bf16.mxu0 0
        %629 = vmatpush1.bf16.msra.mxu0 %v618
        %630 = vmatprep.subr.bf16.mxu0 0
        %631 = vmatpush1.bf16.msra.mxu0 %v619
        %632 = vmatprep.subr.bf16.mxu0 0
        %633 = vmatpush1.bf16.msra.mxu0 %v620
        %634 = vmatprep.subr.bf16.mxu0 0
        %635 = vmatpush1.bf16.msra.mxu0 %v621
        %636 = vmatprep.subr.bf16.mxu0 0
        %637 = vmatpush1.bf16.msra.mxu0 %v622
        %638 = vmatprep.subr.bf16.mxu0 0
        %639 = vmatpush1.bf16.msra.mxu0 %v623
        %640 = vmatprep.subr.bf16.mxu0 0
        %641 = vmatpush1.bf16.msra.mxu0 0
        %642 = vmatprep.subr.bf16.mxu0 0
        %643 = vmatpush1.bf16.msra.mxu0 0
        %644 = vmatprep.subr.bf16.mxu0 0
        %645 = vmatpush1.bf16.msra.mxu0 0
        %646 = vmatprep.subr.bf16.mxu0 0
        %647 = vmatpush1.bf16.msra.mxu0 0
        %648 = vmatprep.subr.bf16.mxu0 0
        %649 = vmatpush1.bf16.msra.mxu0 0
        %650 = vmatprep.subr.bf16.mxu0 0
        %651 = vmatpush1.bf16.msra.mxu0 0
        %652 = vmatprep.subr.bf16.mxu0 0
        %653 = vmatpush1.bf16.msra.mxu0 0
        %654 = vmatprep.subr.bf16.mxu0 0
        %655 = vmatpush1.bf16.msra.mxu0 0
        %656 = vmatprep.mubr.bf16.mxu0 0
        %657 = vmatmul.mubr.bf16.gmra.mrb[0].mxu0 %v615
        %v658 = vpop.f32.mrb[0].mxu0
        %v659 = vadd.f32 0.0, %v658
        %v660 = vpop.f32.mrb[0].mxu0
        %v661 = vpop.f32.mrb[0].mxu0
        %v662 = vpop.f32.mrb[0].mxu0
        %663 = vdwg.mxu0
        %v664 = vadd.f32 %v614, %v659
        %vm665 = vcmask 408576
        %666 = vst.msk [vmem:[#allocation2] sm:$0xff] %vm665, %v664
        %p667 = scmp.eq.s32.totalorder %s34, 1
        // Predicated region
        $region69: #{tpu_custom_call.1} parent=43 // pred_check
          %p668 = pneg %p667
        $region70: #{tpu_custom_call.1} parent=43 // pred_check_branch
          %670 = sbr.rel (%p668) target = $region72
        $region71: #{tpu_custom_call.1} parent=43 // pred_region
          %v671 = vld [vmem:[#allocation2] sm:$0xff]
          %v672 = vld [vmem:[%s370] sm:$0xff]
          %v673 = vmul.f32 %v671, %v672
          %v674 = vld [vmem:[%s417] sm:$0xff]
          %v675 = vadd.f32 %v673, %v674
          %v676 = vmax.f32 %v675, 0.0
          %v677 = vpack.c.bf16 %v676, %v676
          %v678 = vld [vmem:[#allocation9] sm:$0xff]
          %v679 = vld [vmem:[#allocation9 + $0x8] sm:$0xff]
          %v680 = vld [vmem:[#allocation9 + $0x10] sm:$0xff]
          %v681 = vld [vmem:[#allocation9 + $0x18] sm:$0xff]
          %v682 = vld [vmem:[#allocation9 + $0x20] sm:$0xff]
          %v683 = vld [vmem:[#allocation9 + $0x28] sm:$0xff]
          %v684 = vld [vmem:[#allocation9 + $0x30] sm:$0x11]
          %v692 = vunpack.c.l.b16 %v678
          %v693 = vunpack.c.h.b16 %v678
          %v694 = vunpack.c.l.b16 %v679
          %v695 = vunpack.c.h.b16 %v679
          %v696 = vunpack.c.l.b16 %v680
          %v697 = vunpack.c.h.b16 %v680
          %v698 = vunpack.c.l.b16 %v681
          %v699 = vunpack.c.h.b16 %v681
          %v700 = vunpack.c.l.b16 %v682
          %v701 = vunpack.c.h.b16 %v682
          %v702 = vunpack.c.l.b16 %v683
          %v703 = vunpack.c.h.b16 %v683
          %v704 = vunpack.c.l.b16 %v684
          %v705 = vunpack.c.h.b16 %v684
          %v706 = vpack.c.b16 %v694, %v692
          %v707 = vpack.c.b16 %v695, %v693
          %v708 = vpack.c.b16 %v698, %v696
          %v709 = vpack.c.b16 %v699, %v697
          %v710 = vpack.c.b16 %v702, %v700
          %v711 = vpack.c.b16 %v703, %v701
          %v712 = vpack.c.b16 %v704, %v704
          %v713 = vpack.c.b16 %v705, %v705
          %v721 = vsel %vm665, %v677, 0
          %vm723 = vcmask 1040384
          %v725 = vsel %vm723, %v712, 0
          %v728 = vsel %vm723, %v713, 0
          %730 = vmatprep.subr.bf16.mxu0 %v707
          %731 = vmatpush1.bf16.msra.mxu0 %v706
          %732 = vmatprep.subr.bf16.mxu0 %v709
          %733 = vmatpush1.bf16.msra.mxu0 %v708
          %734 = vmatprep.subr.bf16.mxu0 %v711
          %735 = vmatpush1.bf16.msra.mxu0 %v710
          %736 = vmatprep.subr.bf16.mxu0 %v728
          %737 = vmatpush1.bf16.msra.mxu0 %v725
          %738 = vmatprep.subr.bf16.mxu0 0
          %739 = vmatpush1.bf16.msra.mxu0 0
          %740 = vmatprep.subr.bf16.mxu0 0
          %741 = vmatpush1.bf16.msra.mxu0 0
          %742 = vmatprep.subr.bf16.mxu0 0
          %743 = vmatpush1.bf16.msra.mxu0 0
          %744 = vmatprep.subr.bf16.mxu0 0
          %745 = vmatpush1.bf16.msra.mxu0 0
          %746 = vmatprep.subr.bf16.mxu0 0
          %747 = vmatpush1.bf16.msra.mxu0 0
          %748 = vmatprep.subr.bf16.mxu0 0
          %749 = vmatpush1.bf16.msra.mxu0 0
          %750 = vmatprep.subr.bf16.mxu0 0
          %751 = vmatpush1.bf16.msra.mxu0 0
          %752 = vmatprep.subr.bf16.mxu0 0
          %753 = vmatpush1.bf16.msra.mxu0 0
          %754 = vmatprep.subr.bf16.mxu0 0
          %755 = vmatpush1.bf16.msra.mxu0 0
          %756 = vmatprep.subr.bf16.mxu0 0
          %757 = vmatpush1.bf16.msra.mxu0 0
          %758 = vmatprep.subr.bf16.mxu0 0
          %759 = vmatpush1.bf16.msra.mxu0 0
          %760 = vmatprep.subr.bf16.mxu0 0
          %761 = vmatpush1.bf16.msra.mxu0 0
          %762 = vmatprep.mubr.bf16.mxu0 0
          %763 = vmatmul.mubr.bf16.gmra.mrb[0].mxu0 %v721
          %v764 = vpop.f32.mrb[0].mxu0
          %v765 = vadd.f32 0.0, %v764
          %v766 = vpop.f32.mrb[0].mxu0
          %v767 = vadd.f32 0.0, %v766
          %v768 = vpop.f32.mrb[0].mxu0
          %v769 = vpop.f32.mrb[0].mxu0
          %770 = vdwg.mxu0
          %771 = vst [vmem:[%s412] sm:$0xff] %v765
          %772 = vst [vmem:[%s412 + $0x8] sm:$0xff] %v767
        $region72: #{tpu_custom_call.1} parent=43 // pred_fallthru
          _
        %s773 = sand.u32 %s206, 1
        %s774 = scalar_lea.sflag [#allocation5], %s773
        %s775 = sand.u32 %s206, 1
        %s776 = smul.addr %s775, 16
        %s777 = scalar_lea.vmem [#allocation12], %s776
        // Predicated region
        $region73: #{tpu_custom_call.1} parent=43 // pred_check
          %p778 = pneg %p216
        $region74: #{tpu_custom_call.1} parent=43 // pred_check_branch
          %780 = sbr.rel (%p778) target = $region76
        $region75: #{tpu_custom_call.1} parent=43 // pred_region
          %s782 = ssub.s32 256, 256
          %783 = vsyncadd %s774, %s782
          %s784 = smul.addr %s33, 2
          %s785 = smul.addr %s32, 4
          %s786 = sadd.s32 %s784, %s785
          %s787 = smul.addr %s786, 128
          %s788 = scalar_lea.hbm %s6, %s787
          %s790 = sshll.u32 %s777, 4
          %s791 = int_to_ptr.vmem [resolvable:$true] %s790
          %793 = dma.vmem_to_hbm [thread:$0]  %s791, 256, %s788, %s774
        $region76: #{tpu_custom_call.1} parent=43 // pred_fallthru
          _
      $region44: #{tpu_custom_call.1} parent=5 // pred_fallthru
        _
      %p794 = scmp.le.s32.totalorder 2, %s22
      // Predicated region
      $region77: #{tpu_custom_call.1} parent=5 // pred_check
        %p795 = pneg %p794
      $region78: #{tpu_custom_call.1} parent=5 // pred_check_branch
        %797 = sbr.rel (%p795) target = $region80
      $region79: #{tpu_custom_call.1} parent=5 // pred_region
        %s798 = ssub.s32 %s22, 2
        // Predicated region
        $region81: #{tpu_custom_call.1} parent=79 // pred_check
          %p799 = pneg %p222
        $region82: #{tpu_custom_call.1} parent=79 // pred_check_branch
          %801 = sbr.rel (%p799) target = $region84
        $region83: #{tpu_custom_call.1} parent=79 // pred_region
          %s802 = sand.u32 %s207, 1
          %s803 = scalar_lea.sflag [#allocation5], %s802
          %s804 = sand.u32 %s207, 1
          %s805 = smul.addr %s804, 16
          %s806 = scalar_lea.vmem [#allocation12], %s805
          %807 = dma.done %s803, 256
        $region84: #{tpu_custom_call.1} parent=79 // pred_fallthru
          _
      $region80: #{tpu_custom_call.1} parent=5 // pred_fallthru
        _
    $region6: #{tpu_custom_call.1} parent=1 // loop_footer
      %s26 = sadd.s32 1, %s22
    $region7: #{tpu_custom_call.1} parent=1 // loop_footer_branch
      %21 = sbr.rel target = $region3
    $region8: #{tpu_custom_call.1} parent=1 // loop_exit
      _
    %808 = vsyncpa [#allocation4], 1
    %s809 = scalar_lea.sflag [#allocation4], 1
    %810 = vsyncpa %s809, 1
    %811 = vsyncpa [#allocation7], 1
    %s812 = scalar_lea.sflag [#allocation7], 1
    %813 = vsyncpa %s812, 1
    %814 = vsyncpa [#allocation10], 1
    %815 = vsyncpa [#allocation5], 1
    %s816 = scalar_lea.sflag [#allocation5], 1
    %817 = vsyncpa %s816, 1

</llo_original>
